<compile_context>
chip_gen: v7x
topology: tpu7x:2x2x1
jax: 0.10.0
libtpu: 0.0.40
codegen_flags: <defaults>
</compile_context>

<pallas_src>
import jax
import jax.numpy as jnp
from jax.experimental import pallas as pl
from jax.experimental.pallas import tpu as pltpu


# ---------------- in-kernel helpers (packed complex arithmetic) ----------------

def _pdot(x, w):
    # Packed real matmul; cast activations to the weight dtype (f32 or bf16) at the
    # MXU input only, always accumulate in f32.
    return jnp.dot(x.astype(w.dtype), w, preferred_element_type=jnp.float32)


def _split_pdot(xr, xi, w):
    # First matmul of a stage: inputs kept as separate re/im (no concat needed).
    #   [xr | xi] @ W_packed == xr @ W_packed[:d] + xi @ W_packed[d:]
    m = xr.shape[-1]
    return _pdot(xr, w[:m]) + _pdot(xi, w[m:])


# ---------------- Pallas kernel ----------------

def feature_transform_kernel(xr_ref, xi_ref, r1_ref, dw_ref, r2_ref, ow_ref, o_ref):
    xr = xr_ref[...]                                  # (tn, d)  act dtype (bf16 or f32)
    xi = xi_ref[...]                                  # (tn, d)
    d = xr.shape[-1]

    # ----- res1 (d -> d complex), residual + outer ReLU -----
    h = jnp.maximum(_split_pdot(xr, xi, r1_ref[0]), 0.0)   # (tn, 2d) packed [re | im]
    h = jnp.maximum(_pdot(h, r1_ref[1]), 0.0)
    h = _pdot(h, r1_ref[2])
    gr = jnp.maximum(xr.astype(jnp.float32) + h[:, :d], 0.0)   # ComplexReLU(residual)
    gi = jnp.maximum(xi.astype(jnp.float32) + h[:, d:], 0.0)

    # ----- down (d -> d/2 complex) + ReLU: packed output (tn, d) = [re(d/2) | im(d/2)] -----
    h = jnp.maximum(_split_pdot(gr, gi, dw_ref[...]), 0.0)

    # ----- res2 (d/2 -> d/2 complex), residual + outer ReLU, packed throughout -----
    h2 = jnp.maximum(_pdot(h, r2_ref[0]), 0.0)
    h2 = jnp.maximum(_pdot(h2, r2_ref[1]), 0.0)
    h2 = _pdot(h2, r2_ref[2])
    h = jnp.maximum(h + h2, 0.0)

    # ----- out (d/2 -> 1 complex): VPU multiply + lane reduction (no 1-wide matmul) -----
    vr = ow_ref[0:1, :]                               # (1, d):  [wr | -wi]
    vi = ow_ref[1:2, :]                               # (1, d):  [wi |  wr]
    yr = jnp.sum(h * vr, axis=-1, keepdims=True)      # (tn, 1)
    yi = jnp.sum(h * vi, axis=-1, keepdims=True)      # (tn, 1)
    o_ref[...] = jnp.concatenate([yr, yi], axis=-1)   # single fused store


# ---------------- weight packing (wrapper-side, plain JAX) ----------------

def _pack_cweight(wr, wi, dtype):
    # [[wr, wi], [-wi, wr]] so that [xr|xi] @ W_packed = [xr@wr - xi@wi | xr@wi + xi@wr]
    top = jnp.concatenate([wr, wi], axis=1)
    bot = jnp.concatenate([-wi, wr], axis=1)
    return jnp.concatenate([top, bot], axis=0).astype(dtype)


def pack_feature_transform_weights(weights, *, matmul_dtype=jnp.bfloat16):
    """weights: 16 float32 (in, out) arrays (fc_r/fc_i pairs, x @ W convention)."""
    (r1w1r, r1w1i, r1w2r, r1w2i, r1w3r, r1w3i,
     dwr, dwi,
     r2w1r, r2w1i, r2w2r, r2w2i, r2w3r, r2w3i,
     owr, owi) = weights

    r1 = jnp.stack([_pack_cweight(r1w1r, r1w1i, matmul_dtype),
                    _pack_cweight(r1w2r, r1w2i, matmul_dtype),
                    _pack_cweight(r1w3r, r1w3i, matmul_dtype)], axis=0)   # (3, 2d, 2d)
    dn = _pack_cweight(dwr, dwi, matmul_dtype)                            # (2d, d)
    r2 = jnp.stack([_pack_cweight(r2w1r, r2w1i, matmul_dtype),
                    _pack_cweight(r2w2r, r2w2i, matmul_dtype),
                    _pack_cweight(r2w3r, r2w3i, matmul_dtype)], axis=0)   # (3, d, d)
    # out (d/2 -> 1): kept f32, used on the VPU/XLU reduce path.
    vr = jnp.concatenate([owr[:, 0], -owi[:, 0]], axis=0)  # yr = h . vr
    vi = jnp.concatenate([owi[:, 0], owr[:, 0]], axis=0)   # yi = h . vi
    ow = jnp.stack([vr, vi], axis=0).astype(jnp.float32)   # (2, d)
    return r1, dn, r2, ow


# ---------------- tile selection & wrapper ----------------

def _tensorcores_per_chip():
    # Only v7x exposes 2 TensorCores per chip; v5e/v6e are single-TC (grid = serial loop).
    try:
        kind = jax.devices()[0].device_kind.lower()
        return 2 if "v7" in kind else 1
    except Exception:
        return 1


def _choose_tile(N, tn_cap, d, act_itemsize, num_cores):
    assert N % 8 == 0, "row count must be a multiple of 8"
    # Per-row VMEM estimate: double-buffered xr/xi tiles + ~6 live f32 packed temporaries.
    per_row = 2 * 2 * d * act_itemsize + 6 * 2 * d * 4
    vmem_budget = 12 << 20                       # fits every generation's default scope
    cap = max(8, min(tn_cap, (vmem_budget // per_row) // 8 * 8))
    tn = min(N, cap)
    # Only split for >=2 grid steps on multi-TensorCore chips (v7x); on single-TC chips
    # extra grid steps are pure per-step overhead.
    if num_cores >= 2 and N >= 16:
        tn = min(tn, N // 2)
    tn = max(8, (tn // 8) * 8)
    while N % tn != 0:
        tn -= 8
    return max(tn, 8)


def feature_transform_pallas(x_re, x_im, weights, *, tn=8192, use_bf16=True):
    """weights: tuple of 16 float32 arrays, each (in_features, out_features)."""
    N, d = x_re.shape
    act_dtype = jnp.bfloat16 if use_bf16 else jnp.float32
    mm_dtype = jnp.bfloat16 if use_bf16 else jnp.float32
    ncores = _tensorcores_per_chip()
    tn = _choose_tile(N, tn, d, jnp.dtype(act_dtype).itemsize, ncores)

    r1, dn, r2, ow = pack_feature_transform_weights(weights, matmul_dtype=mm_dtype)

    xr = x_re.astype(act_dtype)   # bf16 input stream halves the only N-scaling HBM traffic
    xi = x_im.astype(act_dtype)

    out = pl.pallas_call(
        feature_transform_kernel,
        out_shape=jax.ShapeDtypeStruct((N, 2), jnp.float32),
        grid_spec=pltpu.PrefetchScalarGridSpec(
            num_scalar_prefetch=0,
            grid=(N // tn,),
            in_specs=[
                pl.BlockSpec((tn, d), lambda i: (i, 0)),        # x real (tiled)
                pl.BlockSpec((tn, d), lambda i: (i, 0)),        # x imag (tiled)
                pl.BlockSpec(r1.shape, lambda i: (0, 0, 0)),    # res1 weights (resident)
                pl.BlockSpec(dn.shape, lambda i: (0, 0)),       # down weight
                pl.BlockSpec(r2.shape, lambda i: (0, 0, 0)),    # res2 weights
                pl.BlockSpec(ow.shape, lambda i: (0, 0)),       # out vectors
            ],
            out_specs=pl.BlockSpec((tn, 2), lambda i: (i, 0)),
        ),
        compiler_params=pltpu.CompilerParams(
            dimension_semantics=("parallel",),
            vmem_limit_bytes=32 << 20),
    )(xr, xi, r1, dn, r2, ow)

    return (out[:, 0:1] + 1j * out[:, 1:2]).astype(jnp.complex64)


# ---------------- parameter construction (PyTorch-Linear-like init) ----------------

def _make_linear_weight(key, in_f, out_f):
    # nn.Linear default: U(-1/sqrt(in), 1/sqrt(in)), weight (out, in); store transposed (in, out).
    bound = 1.0 / jnp.sqrt(jnp.float32(in_f))
    w = jax.random.uniform(key, (out_f, in_f), jnp.float32, -bound, bound)
    return w.T


def make_feature_transform_weights(key, d):
    dims = [
        (d, d), (d, d), (d, d),                                  # res1: CL1, CL2, CL3
        (d, d // 2),                                             # down
        (d // 2, d // 2), (d // 2, d // 2), (d // 2, d // 2),    # res2
        (d // 2, 1),                                             # out
    ]
    keys = jax.random.split(key, 2 * len(dims))
    weights = []
    for idx, (i_f, o_f) in enumerate(dims):
        weights.append(_make_linear_weight(keys[2 * idx], i_f, o_f))      # fc_r
        weights.append(_make_linear_weight(keys[2 * idx + 1], i_f, o_f))  # fc_i
    return tuple(weights)


# ---------------- pure-JAX reference (complex64) for verification ----------------

def feature_transform_ref(x, weights):
    w = [wr + 1j * wi for wr, wi in zip(weights[0::2], weights[1::2])]
    w = [wc.astype(jnp.complex64) for wc in w]

    def crelu(z):
        return jnp.maximum(z.real, 0.0) + 1j * jnp.maximum(z.imag, 0.0)

    def res(z, w1, w2, w3):
        h = crelu(z @ w1)
        h = crelu(h @ w2)
        return z + h @ w3

    g = crelu(res(x, w[0], w[1], w[2]))
    g = crelu(g @ w[3])
    g = crelu(res(g, w[4], w[5], w[6]))
    return g @ w[7]


if __name__ == "__main__":
    N, d = 256, 32  # small shapes: 256 rows, feature dim 32 (d//2 = 16)
    key = jax.random.PRNGKey(0)
    k_re, k_im, k_w = jax.random.split(key, 3)

    x_re = jax.random.normal(k_re, (N, d), jnp.float32)
    x_im = jax.random.normal(k_im, (N, d), jnp.float32)
    weights = make_feature_transform_weights(k_w, d)

    ref = feature_transform_ref((x_re + 1j * x_im).astype(jnp.complex64), weights)

    # Strict f32 path (multi-step grid at tn=128) — tight tolerance correctness anchor.
    out_f32 = feature_transform_pallas(x_re, x_im, weights, tn=128, use_bf16=False)
    out_f32 = jax.block_until_ready(out_f32)
    assert out_f32.shape == (N, 1)
    assert jnp.allclose(out_f32.real, ref.real, atol=1e-4, rtol=1e-4)
    assert jnp.allclose(out_f32.imag, ref.imag, atol=1e-4, rtol=1e-4)

    # Default path: bf16 weights + bf16 activation stream, f32 accumulation.
    out = feature_transform_pallas(x_re, x_im, weights)
    out = jax.block_until_ready(out)
    assert out.shape == (N, 1)
    assert jnp.allclose(out.real, ref.real, atol=0.25, rtol=0.05)
    assert jnp.allclose(out.imag, ref.imag, atol=0.25, rtol=0.05)

    print("KERNEL_OK")
</pallas_src>

<mosaic_0001>
module attributes {stable_mosaic.version = 11 : i64} {
  func.func @feature_transform_kernel(%arg0: i32, %arg1: memref<128x32xf32, #tpu.memory_space<vmem>>, %arg2: memref<128x32xf32, #tpu.memory_space<vmem>>, %arg3: memref<3x64x64xf32, #tpu.memory_space<vmem>>, %arg4: memref<64x32xf32, #tpu.memory_space<vmem>>, %arg5: memref<3x32x32xf32, #tpu.memory_space<vmem>>, %arg6: memref<2x32xf32, #tpu.memory_space<vmem>>, %arg7: memref<128x2xf32, #tpu.memory_space<vmem>>) attributes {dimension_semantics = [#tpu.dimension_semantics<parallel>], iteration_bounds = array<i64: 2>, scalar_prefetch = 0 : i64, scratch_operands = 0 : i64, tpu.core_type = #tpu.core_type<tc>, window_params = [{transform_indices = @transform_0, window_bounds = array<i64: 128, 32>}, {transform_indices = @transform_1, window_bounds = array<i64: 128, 32>}, {pipeline_mode = #tpu.pipeline_mode<synchronous>, transform_indices = @transform_2, window_bounds = array<i64: 3, 64, 64>}, {pipeline_mode = #tpu.pipeline_mode<synchronous>, transform_indices = @transform_3, window_bounds = array<i64: 64, 32>}, {pipeline_mode = #tpu.pipeline_mode<synchronous>, transform_indices = @transform_4, window_bounds = array<i64: 3, 32, 32>}, {pipeline_mode = #tpu.pipeline_mode<synchronous>, transform_indices = @transform_5, window_bounds = array<i64: 2, 32>}, {transform_indices = @transform_6, window_bounds = array<i64: 128, 2>}]} {
    %c0 = arith.constant 0 : index
    %c0_0 = arith.constant 0 : index
    %0 = vector.load %arg1[%c0, %c0_0] : memref<128x32xf32, #tpu.memory_space<vmem>>, vector<128x32xf32>
    %c0_1 = arith.constant 0 : index
    %c0_2 = arith.constant 0 : index
    %1 = vector.load %arg2[%c0_1, %c0_2] : memref<128x32xf32, #tpu.memory_space<vmem>>, vector<128x32xf32>
    %c0_3 = arith.constant 0 : index
    %c0_4 = arith.constant 0 : index
    %c0_5 = arith.constant 0 : index
    %2 = vector.load %arg3[%c0_3, %c0_4, %c0_5] : memref<3x64x64xf32, #tpu.memory_space<vmem>>, vector<1x64x64xf32>
    %3 = vector.shape_cast %2 : vector<1x64x64xf32> to vector<64x64xf32>
    %4 = vector.extract_strided_slice %3 {offsets = [0, 0], sizes = [32, 64], strides = [1, 1]} : vector<64x64xf32> to vector<32x64xf32>
    %cst = arith.constant dense<0.000000e+00> : vector<128x64xf32>
    %5 = tpu.matmul %0, %4, %cst {dimension_numbers = #tpu.dot_dimension_numbers<[1], [0], [0], [1], [0, 0, 1, 1], [], []>} : vector<128x32xf32>, vector<32x64xf32>, vector<128x64xf32> -> vector<128x64xf32>
    %6 = vector.extract_strided_slice %3 {offsets = [32, 0], sizes = [32, 64], strides = [1, 1]} : vector<64x64xf32> to vector<32x64xf32>
    %cst_6 = arith.constant dense<0.000000e+00> : vector<128x64xf32>
    %7 = tpu.matmul %1, %6, %cst_6 {dimension_numbers = #tpu.dot_dimension_numbers<[1], [0], [0], [1], [0, 0, 1, 1], [], []>} : vector<128x32xf32>, vector<32x64xf32>, vector<128x64xf32> -> vector<128x64xf32>
    %8 = arith.addf %5, %7 : vector<128x64xf32>
    %cst_7 = arith.constant 0.000000e+00 : f32
    %9 = vector.broadcast %cst_7 : f32 to vector<128x64xf32>
    %10 = arith.maximumf %8, %9 : vector<128x64xf32>
    %c1 = arith.constant 1 : index
    %c0_8 = arith.constant 0 : index
    %c0_9 = arith.constant 0 : index
    %11 = vector.load %arg3[%c1, %c0_8, %c0_9] : memref<3x64x64xf32, #tpu.memory_space<vmem>>, vector<1x64x64xf32>
    %12 = vector.shape_cast %11 : vector<1x64x64xf32> to vector<64x64xf32>
    %cst_10 = arith.constant dense<0.000000e+00> : vector<128x64xf32>
    %13 = tpu.matmul %10, %12, %cst_10 {dimension_numbers = #tpu.dot_dimension_numbers<[1], [0], [0], [1], [0, 0, 1, 1], [], []>} : vector<128x64xf32>, vector<64x64xf32>, vector<128x64xf32> -> vector<128x64xf32>
    %cst_11 = arith.constant 0.000000e+00 : f32
    %14 = vector.broadcast %cst_11 : f32 to vector<128x64xf32>
    %15 = arith.maximumf %13, %14 : vector<128x64xf32>
    %c2 = arith.constant 2 : index
    %c0_12 = arith.constant 0 : index
    %c0_13 = arith.constant 0 : index
    %16 = vector.load %arg3[%c2, %c0_12, %c0_13] : memref<3x64x64xf32, #tpu.memory_space<vmem>>, vector<1x64x64xf32>
    %17 = vector.shape_cast %16 : vector<1x64x64xf32> to vector<64x64xf32>
    %cst_14 = arith.constant dense<0.000000e+00> : vector<128x64xf32>
    %18 = tpu.matmul %15, %17, %cst_14 {dimension_numbers = #tpu.dot_dimension_numbers<[1], [0], [0], [1], [0, 0, 1, 1], [], []>} : vector<128x64xf32>, vector<64x64xf32>, vector<128x64xf32> -> vector<128x64xf32>
    %19 = vector.extract_strided_slice %18 {offsets = [0, 0], sizes = [128, 32], strides = [1, 1]} : vector<128x64xf32> to vector<128x32xf32>
    %20 = arith.addf %0, %19 : vector<128x32xf32>
    %cst_15 = arith.constant 0.000000e+00 : f32
    %21 = vector.broadcast %cst_15 : f32 to vector<128x32xf32>
    %22 = arith.maximumf %20, %21 : vector<128x32xf32>
    %23 = vector.extract_strided_slice %18 {offsets = [0, 32], sizes = [128, 32], strides = [1, 1]} : vector<128x64xf32> to vector<128x32xf32>
    %24 = arith.addf %1, %23 : vector<128x32xf32>
    %cst_16 = arith.constant 0.000000e+00 : f32
    %25 = vector.broadcast %cst_16 : f32 to vector<128x32xf32>
    %26 = arith.maximumf %24, %25 : vector<128x32xf32>
    %c0_17 = arith.constant 0 : index
    %c0_18 = arith.constant 0 : index
    %27 = vector.load %arg4[%c0_17, %c0_18] : memref<64x32xf32, #tpu.memory_space<vmem>>, vector<64x32xf32>
    %28 = vector.extract_strided_slice %27 {offsets = [0, 0], sizes = [32, 32], strides = [1, 1]} : vector<64x32xf32> to vector<32x32xf32>
    %cst_19 = arith.constant dense<0.000000e+00> : vector<128x32xf32>
    %29 = tpu.matmul %22, %28, %cst_19 {dimension_numbers = #tpu.dot_dimension_numbers<[1], [0], [0], [1], [0, 0, 1, 1], [], []>} : vector<128x32xf32>, vector<32x32xf32>, vector<128x32xf32> -> vector<128x32xf32>
    %30 = vector.extract_strided_slice %27 {offsets = [32, 0], sizes = [32, 32], strides = [1, 1]} : vector<64x32xf32> to vector<32x32xf32>
    %cst_20 = arith.constant dense<0.000000e+00> : vector<128x32xf32>
    %31 = tpu.matmul %26, %30, %cst_20 {dimension_numbers = #tpu.dot_dimension_numbers<[1], [0], [0], [1], [0, 0, 1, 1], [], []>} : vector<128x32xf32>, vector<32x32xf32>, vector<128x32xf32> -> vector<128x32xf32>
    %32 = arith.addf %29, %31 : vector<128x32xf32>
    %cst_21 = arith.constant 0.000000e+00 : f32
    %33 = vector.broadcast %cst_21 : f32 to vector<128x32xf32>
    %34 = arith.maximumf %32, %33 : vector<128x32xf32>
    %c0_22 = arith.constant 0 : index
    %c0_23 = arith.constant 0 : index
    %c0_24 = arith.constant 0 : index
    %35 = vector.load %arg5[%c0_22, %c0_23, %c0_24] : memref<3x32x32xf32, #tpu.memory_space<vmem>>, vector<1x32x32xf32>
    %36 = vector.shape_cast %35 : vector<1x32x32xf32> to vector<32x32xf32>
    %cst_25 = arith.constant dense<0.000000e+00> : vector<128x32xf32>
    %37 = tpu.matmul %34, %36, %cst_25 {dimension_numbers = #tpu.dot_dimension_numbers<[1], [0], [0], [1], [0, 0, 1, 1], [], []>} : vector<128x32xf32>, vector<32x32xf32>, vector<128x32xf32> -> vector<128x32xf32>
    %cst_26 = arith.constant 0.000000e+00 : f32
    %38 = vector.broadcast %cst_26 : f32 to vector<128x32xf32>
    %39 = arith.maximumf %37, %38 : vector<128x32xf32>
    %c1_27 = arith.constant 1 : index
    %c0_28 = arith.constant 0 : index
    %c0_29 = arith.constant 0 : index
    %40 = vector.load %arg5[%c1_27, %c0_28, %c0_29] : memref<3x32x32xf32, #tpu.memory_space<vmem>>, vector<1x32x32xf32>
    %41 = vector.shape_cast %40 : vector<1x32x32xf32> to vector<32x32xf32>
    %cst_30 = arith.constant dense<0.000000e+00> : vector<128x32xf32>
    %42 = tpu.matmul %39, %41, %cst_30 {dimension_numbers = #tpu.dot_dimension_numbers<[1], [0], [0], [1], [0, 0, 1, 1], [], []>} : vector<128x32xf32>, vector<32x32xf32>, vector<128x32xf32> -> vector<128x32xf32>
    %cst_31 = arith.constant 0.000000e+00 : f32
    %43 = vector.broadcast %cst_31 : f32 to vector<128x32xf32>
    %44 = arith.maximumf %42, %43 : vector<128x32xf32>
    %c2_32 = arith.constant 2 : index
    %c0_33 = arith.constant 0 : index
    %c0_34 = arith.constant 0 : index
    %45 = vector.load %arg5[%c2_32, %c0_33, %c0_34] : memref<3x32x32xf32, #tpu.memory_space<vmem>>, vector<1x32x32xf32>
    %46 = vector.shape_cast %45 : vector<1x32x32xf32> to vector<32x32xf32>
    %cst_35 = arith.constant dense<0.000000e+00> : vector<128x32xf32>
    %47 = tpu.matmul %44, %46, %cst_35 {dimension_numbers = #tpu.dot_dimension_numbers<[1], [0], [0], [1], [0, 0, 1, 1], [], []>} : vector<128x32xf32>, vector<32x32xf32>, vector<128x32xf32> -> vector<128x32xf32>
    %48 = arith.addf %34, %47 : vector<128x32xf32>
    %cst_36 = arith.constant 0.000000e+00 : f32
    %49 = vector.broadcast %cst_36 : f32 to vector<128x32xf32>
    %50 = arith.maximumf %48, %49 : vector<128x32xf32>
    %c0_37 = arith.constant 0 : index
    %c0_38 = arith.constant 0 : index
    %51 = vector.load %arg6[%c0_37, %c0_38] : memref<2x32xf32, #tpu.memory_space<vmem>>, vector<1x32xf32>
    %c1_39 = arith.constant 1 : index
    %c0_40 = arith.constant 0 : index
    %52 = vector.load %arg6[%c1_39, %c0_40] : memref<2x32xf32, #tpu.memory_space<vmem>>, vector<1x32xf32>
    %53 = vector.broadcast %51 : vector<1x32xf32> to vector<128x32xf32>
    %54 = arith.mulf %50, %53 : vector<128x32xf32>
    %cst_41 = arith.constant dense<0.000000e+00> : vector<128xf32>
    %55 = vector.multi_reduction <add>, %54, %cst_41 [1] : vector<128x32xf32> to vector<128xf32>
    %56 = vector.shape_cast %55 : vector<128xf32> to vector<128x1xf32>
    %57 = vector.broadcast %52 : vector<1x32xf32> to vector<128x32xf32>
    %58 = arith.mulf %50, %57 : vector<128x32xf32>
    %cst_42 = arith.constant dense<0.000000e+00> : vector<128xf32>
    %59 = vector.multi_reduction <add>, %58, %cst_42 [1] : vector<128x32xf32> to vector<128xf32>
    %60 = vector.shape_cast %59 : vector<128xf32> to vector<128x1xf32>
    %61 = tpu.concatenate %56, %60 in 1 : vector<128x1xf32>, vector<128x1xf32> -> vector<128x2xf32>
    %c0_43 = arith.constant 0 : index
    %c0_44 = arith.constant 0 : index
    %62 = vector.load %arg7[%c0_43, %c0_44] : memref<128x2xf32, #tpu.memory_space<vmem>>, vector<128x2xf32>
    tpu.vector_store %arg7[%c0_43, %c0_44], %61 {strides = array<i32>} : memref<128x2xf32, #tpu.memory_space<vmem>>, vector<128x2xf32>,
    return
  }
  func.func @transform_0(%arg0: i32) -> (i32, i32) {
    %c0_i32 = arith.constant 0 : i32
    %c0_i32_0 = arith.constant 0 : i32
    return %arg0, %c0_i32 : i32, i32
  }
  func.func @transform_1(%arg0: i32) -> (i32, i32) {
    %c0_i32 = arith.constant 0 : i32
    %c0_i32_0 = arith.constant 0 : i32
    return %arg0, %c0_i32 : i32, i32
  }
  func.func @transform_2(%arg0: i32) -> (i32, i32, i32) {
    %c0_i32 = arith.constant 0 : i32
    %c0_i32_0 = arith.constant 0 : i32
    %c0_i32_1 = arith.constant 0 : i32
    %c0_i32_2 = arith.constant 0 : i32
    return %c0_i32, %c0_i32_0, %c0_i32_1 : i32, i32, i32
  }
  func.func @transform_3(%arg0: i32) -> (i32, i32) {
    %c0_i32 = arith.constant 0 : i32
    %c0_i32_0 = arith.constant 0 : i32
    %c0_i32_1 = arith.constant 0 : i32
    return %c0_i32, %c0_i32_0 : i32, i32
  }
  func.func @transform_4(%arg0: i32) -> (i32, i32, i32) {
    %c0_i32 = arith.constant 0 : i32
    %c0_i32_0 = arith.constant 0 : i32
    %c0_i32_1 = arith.constant 0 : i32
    %c0_i32_2 = arith.constant 0 : i32
    return %c0_i32, %c0_i32_0, %c0_i32_1 : i32, i32, i32
  }
  func.func @transform_5(%arg0: i32) -> (i32, i32) {
    %c0_i32 = arith.constant 0 : i32
    %c0_i32_0 = arith.constant 0 : i32
    %c0_i32_1 = arith.constant 0 : i32
    return %c0_i32, %c0_i32_0 : i32, i32
  }
  func.func @transform_6(%arg0: i32) -> (i32, i32) {
    %c0_i32 = arith.constant 0 : i32
    %c0_i32_0 = arith.constant 0 : i32
    return %arg0, %c0_i32 : i32, i32
  }
}

</mosaic_0001>

<llo_original>
// kernel: tpu_custom_call.1
$region0: #{tpu_custom_call.1}
  #allocation0 [shape = 'u32[]', space=smem, size = 0x4, offset = 0x4, fixed_abs, tag = 'smem constant byte address 0x4 - core index']
  #allocation1 [shape = 'u32[144,128]{1,0:T(1,128)}', space=vmem, size = 0x12000, scoped, tag = 'internal scratch']
  %s0 = inlined_call_operand.vmem [shape: f32[256,32], index: 0, kind: input, shape index: {}]
  %s1 = inlined_call_operand.vmem [shape: f32[256,32], index: 1, kind: input, shape index: {}]
  %s2 = inlined_call_operand.vmem [shape: f32[3,64,64], index: 2, kind: input, shape index: {}]
  %s3 = inlined_call_operand.vmem [shape: f32[64,32], index: 3, kind: input, shape index: {}]
  %s4 = inlined_call_operand.vmem [shape: f32[3,32,32], index: 4, kind: input, shape index: {}]
  %s5 = inlined_call_operand.vmem [shape: f32[2,32], index: 5, kind: input, shape index: {}]
  %s6 = inlined_call_operand.vmem [shape: f32[256,2], index: 6, kind: output, shape index: {}]
  %s7 = sld [smem:[#allocation0]]
  $region57: #{tpu_custom_call.1} parent=0
    _
  %s9 = ssub.s32 1, %s7
  %s10 = scalar_select 0, %s9, %s7
  loop: start=0, step=1, limit=4
  $region2: #{tpu_custom_call.1} parent=0 // loop_pre_header
    _
  $region3: #{tpu_custom_call.1} parent=0 // loop_header
    %s12 = sphi 0, %s16
    %p13 = scmp.ge.s32.totalorder %s12, 4
    %s22 = sphi 0, %s24
    %s25 = sphi 0, %s22
    %s26 = sphi 0, %s25
    %s42 = sphi 0, %s26
    %s48 = sphi 0, %s50
    %s51 = sphi 0, %s48
    %s52 = sphi 0, %s51
    %s68 = sphi 0, %s52
    %s72 = sphi 0, %s72
    %s74 = sphi 0, %s72
    %s75 = sphi 0, %s74
    %s89 = sphi 0, %s75
    %s93 = sphi 0, %s93
    %s95 = sphi 0, %s93
    %s96 = sphi 0, %s95
    %s110 = sphi 0, %s96
    %s114 = sphi 0, %s114
    %s116 = sphi 0, %s114
    %s117 = sphi 0, %s116
    %s131 = sphi 0, %s117
    %s135 = sphi 0, %s135
    %s137 = sphi 0, %s135
    %s138 = sphi 0, %s137
    %s152 = sphi 0, %s138
    %s158 = sphi 0, %s160
    %s161 = sphi 0, %s158
    %s162 = sphi 0, %s161
    %s178 = sphi 0, %s162
  $region4: #{tpu_custom_call.1} parent=0 // loop_header_branch
    %15 = sbr.rel (%p13) target = $region8
  $region5: #{tpu_custom_call.1} parent=0 // loop_body
    %s17 = ssub.s32 %s12, 1
    %s18 = ssub.s32 %s12, 2
    %s19 = sadd.s32 %s12, 1
    %s20 = ssub.s32 %s12, %s19
    %p21 = scmp.eq.s32.totalorder %s20, 0
    %s23 = sadd.s32 %s22, 1
    %s24 = scalar_select %p21, %s22, %s23
    %p27 = pneg %p21
    %p28 = scmp.eq.s32.totalorder %s12, 1
    %p29 = por %p27, %p28
    %p30 = scmp.ne.s32.totalorder %s22, %s25
    %p31 = scmp.eq.s32.totalorder %s12, 0
    %p32 = por %p30, %p31
    %p33 = scmp.ne.s32.totalorder %s22, %s25
    %p34 = scmp.eq.s32.totalorder %s17, 1
    %p35 = por %p33, %p34
    %p36 = scmp.ne.s32.totalorder %s25, %s26
    %p37 = scmp.eq.s32.totalorder %s17, 0
    %p38 = por %p36, %p37
    %p39 = scmp.ne.s32.totalorder %s25, %s26
    %p40 = scmp.eq.s32.totalorder %s18, 1
    %p41 = por %p39, %p40
    %p43 = scmp.ne.s32.totalorder %s26, %s42
    %p44 = scmp.eq.s32.totalorder %s18, 0
    %p45 = por %p43, %p44
    %s46 = ssub.s32 %s12, %s19
    %p47 = scmp.eq.s32.totalorder %s46, 0
    %s49 = sadd.s32 %s48, 1
    %s50 = scalar_select %p47, %s48, %s49
    %p53 = pneg %p47
    %p54 = scmp.eq.s32.totalorder %s12, 1
    %p55 = por %p53, %p54
    %p56 = scmp.ne.s32.totalorder %s48, %s51
    %p57 = scmp.eq.s32.totalorder %s12, 0
    %p58 = por %p56, %p57
    %p59 = scmp.ne.s32.totalorder %s48, %s51
    %p60 = scmp.eq.s32.totalorder %s17, 1
    %p61 = por %p59, %p60
    %p62 = scmp.ne.s32.totalorder %s51, %s52
    %p63 = scmp.eq.s32.totalorder %s17, 0
    %p64 = por %p62, %p63
    %p65 = scmp.ne.s32.totalorder %s51, %s52
    %p66 = scmp.eq.s32.totalorder %s18, 1
    %p67 = por %p65, %p66
    %p69 = scmp.ne.s32.totalorder %s52, %s68
    %p70 = scmp.eq.s32.totalorder %s18, 0
    %p71 = por %p69, %p70
    %s73 = sadd.s32 %s72, 1
    %p76 = scmp.eq.s32.totalorder %s12, 1
    %p77 = scmp.ne.s32.totalorder %s72, %s74
    %p78 = scmp.eq.s32.totalorder %s12, 0
    %p79 = por %p77, %p78
    %p80 = scmp.ne.s32.totalorder %s72, %s74
    %p81 = scmp.eq.s32.totalorder %s17, 1
    %p82 = por %p80, %p81
    %p83 = scmp.ne.s32.totalorder %s74, %s75
    %p84 = scmp.eq.s32.totalorder %s17, 0
    %p85 = por %p83, %p84
    %p86 = scmp.ne.s32.totalorder %s74, %s75
    %p87 = scmp.eq.s32.totalorder %s18, 1
    %p88 = por %p86, %p87
    %p90 = scmp.ne.s32.totalorder %s75, %s89
    %p91 = scmp.eq.s32.totalorder %s18, 0
    %p92 = por %p90, %p91
    %s94 = sadd.s32 %s93, 1
    %p97 = scmp.eq.s32.totalorder %s12, 1
    %p98 = scmp.ne.s32.totalorder %s93, %s95
    %p99 = scmp.eq.s32.totalorder %s12, 0
    %p100 = por %p98, %p99
    %p101 = scmp.ne.s32.totalorder %s93, %s95
    %p102 = scmp.eq.s32.totalorder %s17, 1
    %p103 = por %p101, %p102
    %p104 = scmp.ne.s32.totalorder %s95, %s96
    %p105 = scmp.eq.s32.totalorder %s17, 0
    %p106 = por %p104, %p105
    %p107 = scmp.ne.s32.totalorder %s95, %s96
    %p108 = scmp.eq.s32.totalorder %s18, 1
    %p109 = por %p107, %p108
    %p111 = scmp.ne.s32.totalorder %s96, %s110
    %p112 = scmp.eq.s32.totalorder %s18, 0
    %p113 = por %p111, %p112
    %s115 = sadd.s32 %s114, 1
    %p118 = scmp.eq.s32.totalorder %s12, 1
    %p119 = scmp.ne.s32.totalorder %s114, %s116
    %p120 = scmp.eq.s32.totalorder %s12, 0
    %p121 = por %p119, %p120
    %p122 = scmp.ne.s32.totalorder %s114, %s116
    %p123 = scmp.eq.s32.totalorder %s17, 1
    %p124 = por %p122, %p123
    %p125 = scmp.ne.s32.totalorder %s116, %s117
    %p126 = scmp.eq.s32.totalorder %s17, 0
    %p127 = por %p125, %p126
    %p128 = scmp.ne.s32.totalorder %s116, %s117
    %p129 = scmp.eq.s32.totalorder %s18, 1
    %p130 = por %p128, %p129
    %p132 = scmp.ne.s32.totalorder %s117, %s131
    %p133 = scmp.eq.s32.totalorder %s18, 0
    %p134 = por %p132, %p133
    %s136 = sadd.s32 %s135, 1
    %p139 = scmp.eq.s32.totalorder %s12, 1
    %p140 = scmp.ne.s32.totalorder %s135, %s137
    %p141 = scmp.eq.s32.totalorder %s12, 0
    %p142 = por %p140, %p141
    %p143 = scmp.ne.s32.totalorder %s135, %s137
    %p144 = scmp.eq.s32.totalorder %s17, 1
    %p145 = por %p143, %p144
    %p146 = scmp.ne.s32.totalorder %s137, %s138
    %p147 = scmp.eq.s32.totalorder %s17, 0
    %p148 = por %p146, %p147
    %p149 = scmp.ne.s32.totalorder %s137, %s138
    %p150 = scmp.eq.s32.totalorder %s18, 1
    %p151 = por %p149, %p150
    %p153 = scmp.ne.s32.totalorder %s138, %s152
    %p154 = scmp.eq.s32.totalorder %s18, 0
    %p155 = por %p153, %p154
    %s156 = ssub.s32 %s12, %s19
    %p157 = scmp.eq.s32.totalorder %s156, 0
    %s159 = sadd.s32 %s158, 1
    %s160 = scalar_select %p157, %s158, %s159
    %p163 = pneg %p157
    %p164 = scmp.eq.s32.totalorder %s12, 1
    %p165 = por %p163, %p164
    %p166 = scmp.ne.s32.totalorder %s158, %s161
    %p167 = scmp.eq.s32.totalorder %s12, 0
    %p168 = por %p166, %p167
    %p169 = scmp.ne.s32.totalorder %s158, %s161
    %p170 = scmp.eq.s32.totalorder %s17, 1
    %p171 = por %p169, %p170
    %p172 = scmp.ne.s32.totalorder %s161, %s162
    %p173 = scmp.eq.s32.totalorder %s17, 0
    %p174 = por %p172, %p173
    %p175 = scmp.ne.s32.totalorder %s161, %s162
    %p176 = scmp.eq.s32.totalorder %s18, 1
    %p177 = por %p175, %p176
    %p179 = scmp.ne.s32.totalorder %s162, %s178
    %p180 = scmp.eq.s32.totalorder %s18, 0
    %p181 = por %p179, %p180
    %p182 = scmp.le.s32.totalorder 1, %s12
    %p183 = scmp.lt.s32.totalorder %s12, 3
    %p184 = pnand %p182, %p183
    %p185 = pneg %p184
    // Predicated region
    $region9: #{tpu_custom_call.1} parent=5 // pred_check
      _
    $region10: #{tpu_custom_call.1} parent=5 // pred_check_branch
      %187 = sbr.rel (%p184) target = $region12
    $region11: #{tpu_custom_call.1} parent=5 // pred_region
      %s188 = ssub.s32 %s12, 1
      // Predicated region
      $region13: #{tpu_custom_call.1} parent=11 // pred_check
        %p189 = pneg %p85
      $region14: #{tpu_custom_call.1} parent=11 // pred_check_branch
        %191 = sbr.rel (%p189) target = $region16
      $region15: #{tpu_custom_call.1} parent=11 // pred_region
        _
      $region16: #{tpu_custom_call.1} parent=11 // pred_fallthru
        _
      // Predicated region
      $region17: #{tpu_custom_call.1} parent=11 // pred_check
        %p192 = pneg %p106
      $region18: #{tpu_custom_call.1} parent=11 // pred_check_branch
        %194 = sbr.rel (%p192) target = $region20
      $region19: #{tpu_custom_call.1} parent=11 // pred_region
        _
      $region20: #{tpu_custom_call.1} parent=11 // pred_fallthru
        _
      // Predicated region
      $region21: #{tpu_custom_call.1} parent=11 // pred_check
        %p195 = pneg %p127
      $region22: #{tpu_custom_call.1} parent=11 // pred_check_branch
        %197 = sbr.rel (%p195) target = $region24
      $region23: #{tpu_custom_call.1} parent=11 // pred_region
        _
      $region24: #{tpu_custom_call.1} parent=11 // pred_fallthru
        _
      // Predicated region
      $region25: #{tpu_custom_call.1} parent=11 // pred_check
        %p198 = pneg %p148
      $region26: #{tpu_custom_call.1} parent=11 // pred_check_branch
        %200 = sbr.rel (%p198) target = $region28
      $region27: #{tpu_custom_call.1} parent=11 // pred_region
        _
      $region28: #{tpu_custom_call.1} parent=11 // pred_fallthru
        _
    $region12: #{tpu_custom_call.1} parent=5 // pred_fallthru
      _
    %p201 = scmp.lt.s32.totalorder %s12, 2
    // Predicated region
    $region29: #{tpu_custom_call.1} parent=5 // pred_check
      %p202 = pneg %p201
    $region30: #{tpu_custom_call.1} parent=5 // pred_check_branch
      %204 = sbr.rel (%p202) target = $region32
    $region31: #{tpu_custom_call.1} parent=5 // pred_region
      // Predicated region
      $region33: #{tpu_custom_call.1} parent=31 // pred_check
        %p205 = pneg %p32
      $region34: #{tpu_custom_call.1} parent=31 // pred_check_branch
        %207 = sbr.rel (%p205) target = $region36
      $region35: #{tpu_custom_call.1} parent=31 // pred_region
        %s208 = smul.u32 16, %s12
        %p209 = scmp.lt.s32.totalorder %s208, 31
        %s210 = scalar_select %p209, %s208, 31
        %s211 = smul.addr %s210, 8
        %s212 = scalar_lea.vmem %s0, %s211
        %s213 = smul.u32 16, %s12
      $region36: #{tpu_custom_call.1} parent=31 // pred_fallthru
        _
      // Predicated region
      $region37: #{tpu_custom_call.1} parent=31 // pred_check
        %p214 = pneg %p58
      $region38: #{tpu_custom_call.1} parent=31 // pred_check_branch
        %216 = sbr.rel (%p214) target = $region40
      $region39: #{tpu_custom_call.1} parent=31 // pred_region
        %s217 = smul.u32 16, %s12
        %p218 = scmp.lt.s32.totalorder %s217, 31
        %s219 = scalar_select %p218, %s217, 31
        %s220 = smul.addr %s219, 8
        %s221 = scalar_lea.vmem %s1, %s220
        %s222 = smul.u32 16, %s12
      $region40: #{tpu_custom_call.1} parent=31 // pred_fallthru
        _
    $region32: #{tpu_custom_call.1} parent=5 // pred_fallthru
      _
    %p223 = scmp.le.s32.totalorder 1, %s12
    %p224 = scmp.lt.s32.totalorder %s12, 3
    %p225 = pnand %p223, %p224
    %p226 = pneg %p225
    // Predicated region
    $region41: #{tpu_custom_call.1} parent=5 // pred_check
      _
    $region42: #{tpu_custom_call.1} parent=5 // pred_check_branch
      %228 = sbr.rel (%p225) target = $region44
    $region43: #{tpu_custom_call.1} parent=5 // pred_region
      %s229 = ssub.s32 %s12, 1
      %s230 = smul.u32 16, %s17
      %p231 = scmp.lt.s32.totalorder %s230, 31
      %s232 = scalar_select %p231, %s230, 31
      %s233 = smul.addr %s232, 8
      %s234 = scalar_lea.vmem %s0, %s233
      %p235 = pneg %p38
      %p236 = pneg %p35
      %s237 = smul.u32 16, %s17
      %p238 = scmp.lt.s32.totalorder %s237, 31
      %s239 = scalar_select %p238, %s237, 31
      %s240 = smul.addr %s239, 8
      %s241 = scalar_lea.vmem %s1, %s240
      %p242 = pneg %p64
      %p243 = pneg %p61
      %p244 = pneg %p85
      %p245 = pneg %p82
      %p246 = pneg %p106
      %p247 = pneg %p103
      %p248 = pneg %p127
      %p249 = pneg %p124
      %p250 = pneg %p148
      %p251 = pneg %p145
      %p252 = pneg %p174
      %p253 = pneg %p171
      %s254 = smul.u32 16, %s17
      %p255 = scmp.lt.s32.totalorder %s254, 31
      %s256 = scalar_select %p255, %s254, 31
      %s257 = smul.addr %s256, 8
      %s258 = scalar_lea.vmem %s6, %s257
      %s259 = smul.u32 16, %s17
      %p260 = scmp.lt.s32.totalorder %s259, 31
      %s261 = scalar_select %p260, %s259, 31
      %s262 = smul.addr %s261, 8
      %s263 = scalar_lea.vmem %s0, %s262
      %s264 = smul.u32 16, %s17
      %s265 = smul.u32 16, %s17
      %p266 = scmp.lt.s32.totalorder %s265, 31
      %s267 = scalar_select %p266, %s265, 31
      %s268 = smul.addr %s267, 8
      %s269 = scalar_lea.vmem %s1, %s268
      %s270 = smul.u32 16, %s17
      %s271 = smul.u32 16, %s17
      %p272 = scmp.lt.s32.totalorder %s271, 31
      %s273 = scalar_select %p272, %s271, 31
      %s274 = smul.addr %s273, 8
      %s275 = scalar_lea.vmem %s6, %s274
      %s276 = smul.u32 16, %s17
      %v277 = vld [vmem:[%s263] sm:$0xff]
      %v278 = vld [vmem:[%s263 + $0x8] sm:$0xff]
      %v279 = vld [vmem:[%s263 + $0x10] sm:$0xff]
      %v280 = vld [vmem:[%s263 + $0x18] sm:$0xff]
      %v281 = vld [vmem:[%s263 + $0x20] sm:$0xff]
      %v282 = vld [vmem:[%s263 + $0x28] sm:$0xff]
      %v283 = vld [vmem:[%s263 + $0x30] sm:$0xff]
      %v284 = vld [vmem:[%s263 + $0x38] sm:$0xff]
      %v285 = vld [vmem:[%s263 + $0x40] sm:$0xff]
      %v286 = vld [vmem:[%s263 + $0x48] sm:$0xff]
      %v287 = vld [vmem:[%s263 + $0x50] sm:$0xff]
      %v288 = vld [vmem:[%s263 + $0x58] sm:$0xff]
      %v289 = vld [vmem:[%s263 + $0x60] sm:$0xff]
      %v290 = vld [vmem:[%s263 + $0x68] sm:$0xff]
      %v291 = vld [vmem:[%s263 + $0x70] sm:$0xff]
      %v292 = vld [vmem:[%s263 + $0x78] sm:$0xff]
      %v293 = vld [vmem:[%s269] sm:$0xff]
      %v294 = vld [vmem:[%s269 + $0x8] sm:$0xff]
      %v295 = vld [vmem:[%s269 + $0x10] sm:$0xff]
      %v296 = vld [vmem:[%s269 + $0x18] sm:$0xff]
      %v297 = vld [vmem:[%s269 + $0x20] sm:$0xff]
      %v298 = vld [vmem:[%s269 + $0x28] sm:$0xff]
      %v299 = vld [vmem:[%s269 + $0x30] sm:$0xff]
      %v300 = vld [vmem:[%s269 + $0x38] sm:$0xff]
      %v301 = vld [vmem:[%s269 + $0x40] sm:$0xff]
      %v302 = vld [vmem:[%s269 + $0x48] sm:$0xff]
      %v303 = vld [vmem:[%s269 + $0x50] sm:$0xff]
      %v304 = vld [vmem:[%s269 + $0x58] sm:$0xff]
      %v305 = vld [vmem:[%s269 + $0x60] sm:$0xff]
      %v306 = vld [vmem:[%s269 + $0x68] sm:$0xff]
      %v307 = vld [vmem:[%s269 + $0x70] sm:$0xff]
      %v308 = vld [vmem:[%s269 + $0x78] sm:$0xff]
      %v309 = vld [vmem:[%s2] sm:$0xff]
      %v310 = vld [vmem:[%s2 + $0x8] sm:$0xff]
      %v311 = vld [vmem:[%s2 + $0x10] sm:$0xff]
      %v312 = vld [vmem:[%s2 + $0x18] sm:$0xff]
      %v313 = vld [vmem:[%s2 + $0x20] sm:$0xff]
      %v314 = vld [vmem:[%s2 + $0x28] sm:$0xff]
      %v315 = vld [vmem:[%s2 + $0x30] sm:$0xff]
      %v316 = vld [vmem:[%s2 + $0x38] sm:$0xff]
      %vm317 = vcmask 261120
      %v319 = vsel %vm317, %v293, 0
      %v322 = vsel %vm317, %v294, 0
      %v325 = vsel %vm317, %v295, 0
      %v328 = vsel %vm317, %v296, 0
      %v331 = vsel %vm317, %v297, 0
      %v334 = vsel %vm317, %v298, 0
      %v337 = vsel %vm317, %v299, 0
      %v340 = vsel %vm317, %v300, 0
      %v343 = vsel %vm317, %v301, 0
      %v346 = vsel %vm317, %v302, 0
      %v349 = vsel %vm317, %v303, 0
      %v352 = vsel %vm317, %v304, 0
      %v355 = vsel %vm317, %v305, 0
      %v358 = vsel %vm317, %v306, 0
      %v361 = vsel %vm317, %v307, 0
      %v364 = vsel %vm317, %v308, 0
      %366 = vmatprep.subr.mxu0 0.0
      %367 = vmatpush1.msra.mxu0 %v313
      %368 = vmatprep.subr.mxu0 0.0
      %369 = vmatpush1.msra.mxu0 %v314
      %370 = vmatprep.subr.mxu0 0.0
      %371 = vmatpush1.msra.mxu0 %v315
      %372 = vmatprep.subr.mxu0 0.0
      %373 = vmatpush1.msra.mxu0 %v316
      %374 = vmatprep.subr.mxu0 0.0
      %375 = vmatpush1.msra.mxu0 0.0
      %376 = vmatprep.subr.mxu0 0.0
      %377 = vmatpush1.msra.mxu0 0.0
      %378 = vmatprep.subr.mxu0 0.0
      %379 = vmatpush1.msra.mxu0 0.0
      %380 = vmatprep.subr.mxu0 0.0
      %381 = vmatpush1.msra.mxu0 0.0
      %382 = vmatprep.subr.mxu0 0.0
      %383 = vmatpush1.msra.mxu0 0.0
      %384 = vmatprep.subr.mxu0 0.0
      %385 = vmatpush1.msra.mxu0 0.0
      %386 = vmatprep.subr.mxu0 0.0
      %387 = vmatpush1.msra.mxu0 0.0
      %388 = vmatprep.subr.mxu0 0.0
      %389 = vmatpush1.msra.mxu0 0.0
      %390 = vmatprep.subr.mxu0 0.0
      %391 = vmatpush1.msra.mxu0 0.0
      %392 = vmatprep.subr.mxu0 0.0
      %393 = vmatpush1.msra.mxu0 0.0
      %394 = vmatprep.subr.mxu0 0.0
      %395 = vmatpush1.msra.mxu0 0.0
      %396 = vmatprep.subr.mxu0 0.0
      %397 = vmatpush1.msra.mxu0 0.0
      %398 = vmatprep.subr.mxu0 0.0
      %399 = vmatpush1.msra.mxu0 0.0
      %400 = vmatprep.subr.mxu0 0.0
      %401 = vmatpush1.msra.mxu0 0.0
      %402 = vmatprep.subr.mxu0 0.0
      %403 = vmatpush1.msra.mxu0 0.0
      %404 = vmatprep.subr.mxu0 0.0
      %405 = vmatpush1.msra.mxu0 0.0
      %406 = vmatprep.subr.mxu0 0.0
      %407 = vmatpush1.msra.mxu0 0.0
      %408 = vmatprep.subr.mxu0 0.0
      %409 = vmatpush1.msra.mxu0 0.0
      %410 = vmatprep.subr.mxu0 0.0
      %411 = vmatpush1.msra.mxu0 0.0
      %412 = vmatprep.subr.mxu0 0.0
      %413 = vmatpush1.msra.mxu0 0.0
      %414 = vmatprep.subr.mxu0 0.0
      %415 = vmatpush1.msra.mxu0 0.0
      %416 = vmatprep.subr.mxu0 0.0
      %417 = vmatpush1.msra.mxu0 0.0
      %418 = vmatprep.subr.mxu0 0.0
      %419 = vmatpush1.msra.mxu0 0.0
      %420 = vmatprep.subr.mxu0 0.0
      %421 = vmatpush1.msra.mxu0 0.0
      %422 = vmatprep.subr.mxu0 0.0
      %423 = vmatpush1.msra.mxu0 0.0
      %424 = vmatprep.subr.mxu0 0.0
      %425 = vmatpush1.msra.mxu0 0.0
      %426 = vmatprep.subr.mxu0 0.0
      %427 = vmatpush1.msra.mxu0 0.0
      %428 = vmatprep.subr.mxu0 0.0
      %429 = vmatpush1.msra.mxu0 0.0
      %430 = vmatprep.mubr.f32.mxu0 0.0
      %431 = vmatmul.mubr.f32.gmra.mrb[0].mxu0 %v319
      %v432 = vpop.f32.mrb[0].mxu0
      %v433 = vadd.f32 0.0, %v432
      %v434 = vpop.f32.mrb[0].mxu0
      %435 = vmatprep.mubr.f32.mxu0 0.0
      %436 = vmatmul.mubr.f32.gmra.mrb[0].mxu0 %v322
      %v437 = vpop.f32.mrb[0].mxu0
      %v438 = vadd.f32 0.0, %v437
      %v439 = vpop.f32.mrb[0].mxu0
      %440 = vmatprep.mubr.f32.mxu0 0.0
      %441 = vmatmul.mubr.f32.gmra.mrb[0].mxu0 %v325
      %v442 = vpop.f32.mrb[0].mxu0
      %v443 = vadd.f32 0.0, %v442
      %v444 = vpop.f32.mrb[0].mxu0
      %445 = vmatprep.mubr.f32.mxu0 0.0
      %446 = vmatmul.mubr.f32.gmra.mrb[0].mxu0 %v328
      %v447 = vpop.f32.mrb[0].mxu0
      %v448 = vadd.f32 0.0, %v447
      %v449 = vpop.f32.mrb[0].mxu0
      %450 = vmatprep.mubr.f32.mxu0 0.0
      %451 = vmatmul.mubr.f32.gmra.mrb[0].mxu0 %v331
      %v452 = vpop.f32.mrb[0].mxu0
      %v453 = vadd.f32 0.0, %v452
      %v454 = vpop.f32.mrb[0].mxu0
      %455 = vmatprep.mubr.f32.mxu0 0.0
      %456 = vmatmul.mubr.f32.gmra.mrb[0].mxu0 %v334
      %v457 = vpop.f32.mrb[0].mxu0
      %v458 = vadd.f32 0.0, %v457
      %v459 = vpop.f32.mrb[0].mxu0
      %460 = vmatprep.mubr.f32.mxu0 0.0
      %461 = vmatmul.mubr.f32.gmra.mrb[0].mxu0 %v337
      %v462 = vpop.f32.mrb[0].mxu0
      %v463 = vadd.f32 0.0, %v462
      %v464 = vpop.f32.mrb[0].mxu0
      %465 = vmatprep.mubr.f32.mxu0 0.0
      %466 = vmatmul.mubr.f32.gmra.mrb[0].mxu0 %v340
      %v467 = vpop.f32.mrb[0].mxu0
      %v468 = vadd.f32 0.0, %v467
      %v469 = vpop.f32.mrb[0].mxu0
      %470 = vmatprep.mubr.f32.mxu0 0.0
      %471 = vmatmul.mubr.f32.gmra.mrb[0].mxu0 %v343
      %v472 = vpop.f32.mrb[0].mxu0
      %v473 = vadd.f32 0.0, %v472
      %v474 = vpop.f32.mrb[0].mxu0
      %475 = vmatprep.mubr.f32.mxu0 0.0
      %476 = vmatmul.mubr.f32.gmra.mrb[0].mxu0 %v346
      %v477 = vpop.f32.mrb[0].mxu0
      %v478 = vadd.f32 0.0, %v477
      %v479 = vpop.f32.mrb[0].mxu0
      %480 = vmatprep.mubr.f32.mxu0 0.0
      %481 = vmatmul.mubr.f32.gmra.mrb[0].mxu0 %v349
      %v482 = vpop.f32.mrb[0].mxu0
      %v483 = vadd.f32 0.0, %v482
      %v484 = vpop.f32.mrb[0].mxu0
      %485 = vmatprep.mubr.f32.mxu0 0.0
      %486 = vmatmul.mubr.f32.gmra.mrb[0].mxu0 %v352
      %v487 = vpop.f32.mrb[0].mxu0
      %v488 = vadd.f32 0.0, %v487
      %v489 = vpop.f32.mrb[0].mxu0
      %490 = vmatprep.mubr.f32.mxu0 0.0
      %491 = vmatmul.mubr.f32.gmra.mrb[0].mxu0 %v355
      %v492 = vpop.f32.mrb[0].mxu0
      %v493 = vadd.f32 0.0, %v492
      %v494 = vpop.f32.mrb[0].mxu0
      %495 = vmatprep.mubr.f32.mxu0 0.0
      %496 = vmatmul.mubr.f32.gmra.mrb[0].mxu0 %v358
      %v497 = vpop.f32.mrb[0].mxu0
      %v498 = vadd.f32 0.0, %v497
      %v499 = vpop.f32.mrb[0].mxu0
      %500 = vmatprep.mubr.f32.mxu0 0.0
      %501 = vmatmul.mubr.f32.gmra.mrb[0].mxu0 %v361
      %v502 = vpop.f32.mrb[0].mxu0
      %v503 = vadd.f32 0.0, %v502
      %v504 = vpop.f32.mrb[0].mxu0
      %505 = vmatprep.mubr.f32.mxu0 0.0
      %506 = vmatmul.mubr.f32.gmra.mrb[0].mxu0 %v364
      %v507 = vpop.f32.mrb[0].mxu0
      %v508 = vadd.f32 0.0, %v507
      %v509 = vpop.f32.mrb[0].mxu0
      %510 = vdwg.mxu0
      %v512 = vsel %vm317, %v277, 0
      %v515 = vsel %vm317, %v278, 0
      %v518 = vsel %vm317, %v279, 0
      %v521 = vsel %vm317, %v280, 0
      %v524 = vsel %vm317, %v281, 0
      %v527 = vsel %vm317, %v282, 0
      %v530 = vsel %vm317, %v283, 0
      %v533 = vsel %vm317, %v284, 0
      %v536 = vsel %vm317, %v285, 0
      %v539 = vsel %vm317, %v286, 0
      %v542 = vsel %vm317, %v287, 0
      %v545 = vsel %vm317, %v288, 0
      %v548 = vsel %vm317, %v289, 0
      %v551 = vsel %vm317, %v290, 0
      %v554 = vsel %vm317, %v291, 0
      %v557 = vsel %vm317, %v292, 0
      %559 = vmatprep.subr.mxu0 0.0
      %560 = vmatpush1.msra.mxu0 %v309
      %561 = vmatprep.subr.mxu0 0.0
      %562 = vmatpush1.msra.mxu0 %v310
      %563 = vmatprep.subr.mxu0 0.0
      %564 = vmatpush1.msra.mxu0 %v311
      %565 = vmatprep.subr.mxu0 0.0
      %566 = vmatpush1.msra.mxu0 %v312
      %567 = vmatprep.subr.mxu0 0.0
      %568 = vmatpush1.msra.mxu0 0.0
      %569 = vmatprep.subr.mxu0 0.0
      %570 = vmatpush1.msra.mxu0 0.0
      %571 = vmatprep.subr.mxu0 0.0
      %572 = vmatpush1.msra.mxu0 0.0
      %573 = vmatprep.subr.mxu0 0.0
      %574 = vmatpush1.msra.mxu0 0.0
      %575 = vmatprep.subr.mxu0 0.0
      %576 = vmatpush1.msra.mxu0 0.0
      %577 = vmatprep.subr.mxu0 0.0
      %578 = vmatpush1.msra.mxu0 0.0
      %579 = vmatprep.subr.mxu0 0.0
      %580 = vmatpush1.msra.mxu0 0.0
      %581 = vmatprep.subr.mxu0 0.0
      %582 = vmatpush1.msra.mxu0 0.0
      %583 = vmatprep.subr.mxu0 0.0
      %584 = vmatpush1.msra.mxu0 0.0
      %585 = vmatprep.subr.mxu0 0.0
      %586 = vmatpush1.msra.mxu0 0.0
      %587 = vmatprep.subr.mxu0 0.0
      %588 = vmatpush1.msra.mxu0 0.0
      %589 = vmatprep.subr.mxu0 0.0
      %590 = vmatpush1.msra.mxu0 0.0
      %591 = vmatprep.subr.mxu0 0.0
      %592 = vmatpush1.msra.mxu0 0.0
      %593 = vmatprep.subr.mxu0 0.0
      %594 = vmatpush1.msra.mxu0 0.0
      %595 = vmatprep.subr.mxu0 0.0
      %596 = vmatpush1.msra.mxu0 0.0
      %597 = vmatprep.subr.mxu0 0.0
      %598 = vmatpush1.msra.mxu0 0.0
      %599 = vmatprep.subr.mxu0 0.0
      %600 = vmatpush1.msra.mxu0 0.0
      %601 = vmatprep.subr.mxu0 0.0
      %602 = vmatpush1.msra.mxu0 0.0
      %603 = vmatprep.subr.mxu0 0.0
      %604 = vmatpush1.msra.mxu0 0.0
      %605 = vmatprep.subr.mxu0 0.0
      %606 = vmatpush1.msra.mxu0 0.0
      %607 = vmatprep.subr.mxu0 0.0
      %608 = vmatpush1.msra.mxu0 0.0
      %609 = vmatprep.subr.mxu0 0.0
      %610 = vmatpush1.msra.mxu0 0.0
      %611 = vmatprep.subr.mxu0 0.0
      %612 = vmatpush1.msra.mxu0 0.0
      %613 = vmatprep.subr.mxu0 0.0
      %614 = vmatpush1.msra.mxu0 0.0
      %615 = vmatprep.subr.mxu0 0.0
      %616 = vmatpush1.msra.mxu0 0.0
      %617 = vmatprep.subr.mxu0 0.0
      %618 = vmatpush1.msra.mxu0 0.0
      %619 = vmatprep.subr.mxu0 0.0
      %620 = vmatpush1.msra.mxu0 0.0
      %621 = vmatprep.subr.mxu0 0.0
      %622 = vmatpush1.msra.mxu0 0.0
      %623 = vmatprep.mubr.f32.mxu0 0.0
      %624 = vmatmul.mubr.f32.gmra.mrb[0].mxu0 %v512
      %v625 = vpop.f32.mrb[0].mxu0
      %v626 = vadd.f32 %v433, %v625
      %v627 = vpop.f32.mrb[0].mxu0
      %628 = vmatprep.mubr.f32.mxu0 0.0
      %629 = vmatmul.mubr.f32.gmra.mrb[0].mxu0 %v515
      %v630 = vpop.f32.mrb[0].mxu0
      %v631 = vadd.f32 %v438, %v630
      %v632 = vpop.f32.mrb[0].mxu0
      %633 = vmatprep.mubr.f32.mxu0 0.0
      %634 = vmatmul.mubr.f32.gmra.mrb[0].mxu0 %v518
      %v635 = vpop.f32.mrb[0].mxu0
      %v636 = vadd.f32 %v443, %v635
      %v637 = vpop.f32.mrb[0].mxu0
      %638 = vmatprep.mubr.f32.mxu0 0.0
      %639 = vmatmul.mubr.f32.gmra.mrb[0].mxu0 %v521
      %v640 = vpop.f32.mrb[0].mxu0
      %v641 = vadd.f32 %v448, %v640
      %v642 = vpop.f32.mrb[0].mxu0
      %643 = vmatprep.mubr.f32.mxu0 0.0
      %644 = vmatmul.mubr.f32.gmra.mrb[0].mxu0 %v524
      %v645 = vpop.f32.mrb[0].mxu0
      %v646 = vadd.f32 %v453, %v645
      %v647 = vpop.f32.mrb[0].mxu0
      %648 = vmatprep.mubr.f32.mxu0 0.0
      %649 = vmatmul.mubr.f32.gmra.mrb[0].mxu0 %v527
      %v650 = vpop.f32.mrb[0].mxu0
      %v651 = vadd.f32 %v458, %v650
      %v652 = vpop.f32.mrb[0].mxu0
      %653 = vmatprep.mubr.f32.mxu0 0.0
      %654 = vmatmul.mubr.f32.gmra.mrb[0].mxu0 %v530
      %v655 = vpop.f32.mrb[0].mxu0
      %v656 = vadd.f32 %v463, %v655
      %v657 = vpop.f32.mrb[0].mxu0
      %658 = vmatprep.mubr.f32.mxu0 0.0
      %659 = vmatmul.mubr.f32.gmra.mrb[0].mxu0 %v533
      %v660 = vpop.f32.mrb[0].mxu0
      %v661 = vadd.f32 %v468, %v660
      %v662 = vpop.f32.mrb[0].mxu0
      %663 = vmatprep.mubr.f32.mxu0 0.0
      %664 = vmatmul.mubr.f32.gmra.mrb[0].mxu0 %v536
      %v665 = vpop.f32.mrb[0].mxu0
      %v666 = vadd.f32 %v473, %v665
      %v667 = vpop.f32.mrb[0].mxu0
      %668 = vmatprep.mubr.f32.mxu0 0.0
      %669 = vmatmul.mubr.f32.gmra.mrb[0].mxu0 %v539
      %v670 = vpop.f32.mrb[0].mxu0
      %v671 = vadd.f32 %v478, %v670
      %v672 = vpop.f32.mrb[0].mxu0
      %673 = vmatprep.mubr.f32.mxu0 0.0
      %674 = vmatmul.mubr.f32.gmra.mrb[0].mxu0 %v542
      %v675 = vpop.f32.mrb[0].mxu0
      %v676 = vadd.f32 %v483, %v675
      %v677 = vpop.f32.mrb[0].mxu0
      %678 = vmatprep.mubr.f32.mxu0 0.0
      %679 = vmatmul.mubr.f32.gmra.mrb[0].mxu0 %v545
      %v680 = vpop.f32.mrb[0].mxu0
      %v681 = vadd.f32 %v488, %v680
      %v682 = vpop.f32.mrb[0].mxu0
      %683 = vmatprep.mubr.f32.mxu0 0.0
      %684 = vmatmul.mubr.f32.gmra.mrb[0].mxu0 %v548
      %v685 = vpop.f32.mrb[0].mxu0
      %v686 = vadd.f32 %v493, %v685
      %v687 = vpop.f32.mrb[0].mxu0
      %688 = vmatprep.mubr.f32.mxu0 0.0
      %689 = vmatmul.mubr.f32.gmra.mrb[0].mxu0 %v551
      %v690 = vpop.f32.mrb[0].mxu0
      %v691 = vadd.f32 %v498, %v690
      %v692 = vpop.f32.mrb[0].mxu0
      %693 = vmatprep.mubr.f32.mxu0 0.0
      %694 = vmatmul.mubr.f32.gmra.mrb[0].mxu0 %v554
      %v695 = vpop.f32.mrb[0].mxu0
      %v696 = vadd.f32 %v503, %v695
      %v697 = vpop.f32.mrb[0].mxu0
      %698 = vmatprep.mubr.f32.mxu0 0.0
      %699 = vmatmul.mubr.f32.gmra.mrb[0].mxu0 %v557
      %v700 = vpop.f32.mrb[0].mxu0
      %v701 = vadd.f32 %v508, %v700
      %v702 = vpop.f32.mrb[0].mxu0
      %703 = vdwg.mxu0
      %v704 = vmax.f32 %v626, 0.0
      %v705 = vmax.f32 %v631, 0.0
      %v706 = vmax.f32 %v636, 0.0
      %v707 = vmax.f32 %v641, 0.0
      %v708 = vmax.f32 %v646, 0.0
      %v709 = vmax.f32 %v651, 0.0
      %v710 = vmax.f32 %v656, 0.0
      %v711 = vmax.f32 %v661, 0.0
      %v712 = vmax.f32 %v666, 0.0
      %v713 = vmax.f32 %v671, 0.0
      %v714 = vmax.f32 %v676, 0.0
      %v715 = vmax.f32 %v681, 0.0
      %v716 = vmax.f32 %v686, 0.0
      %v717 = vmax.f32 %v691, 0.0
      %v718 = vmax.f32 %v696, 0.0
      %v719 = vmax.f32 %v701, 0.0
      %s720 = scalar_lea.vmem %s2, 64
      %v721 = vld [vmem:[%s720] sm:$0xff]
      %v722 = vld [vmem:[%s720 + $0x8] sm:$0xff]
      %v723 = vld [vmem:[%s720 + $0x10] sm:$0xff]
      %v724 = vld [vmem:[%s720 + $0x18] sm:$0xff]
      %v725 = vld [vmem:[%s720 + $0x20] sm:$0xff]
      %v726 = vld [vmem:[%s720 + $0x28] sm:$0xff]
      %v727 = vld [vmem:[%s720 + $0x30] sm:$0xff]
      %v728 = vld [vmem:[%s720 + $0x38] sm:$0xff]
      %vm729 = vcmask 523264
      %v731 = vsel %vm729, %v704, 0
      %v734 = vsel %vm729, %v705, 0
      %v737 = vsel %vm729, %v706, 0
      %v740 = vsel %vm729, %v707, 0
      %v743 = vsel %vm729, %v708, 0
      %v746 = vsel %vm729, %v709, 0
      %v749 = vsel %vm729, %v710, 0
      %v752 = vsel %vm729, %v711, 0
      %v755 = vsel %vm729, %v712, 0
      %v758 = vsel %vm729, %v713, 0
      %v761 = vsel %vm729, %v714, 0
      %v764 = vsel %vm729, %v715, 0
      %v767 = vsel %vm729, %v716, 0
      %v770 = vsel %vm729, %v717, 0
      %v773 = vsel %vm729, %v718, 0
      %v776 = vsel %vm729, %v719, 0
      %778 = vmatprep.subr.mxu0 0.0
      %779 = vmatpush1.msra.mxu0 %v721
      %780 = vmatprep.subr.mxu0 0.0
      %781 = vmatpush1.msra.mxu0 %v722
      %782 = vmatprep.subr.mxu0 0.0
      %783 = vmatpush1.msra.mxu0 %v723
      %784 = vmatprep.subr.mxu0 0.0
      %785 = vmatpush1.msra.mxu0 %v724
      %786 = vmatprep.subr.mxu0 0.0
      %787 = vmatpush1.msra.mxu0 %v725
      %788 = vmatprep.subr.mxu0 0.0
      %789 = vmatpush1.msra.mxu0 %v726
      %790 = vmatprep.subr.mxu0 0.0
      %791 = vmatpush1.msra.mxu0 %v727
      %792 = vmatprep.subr.mxu0 0.0
      %793 = vmatpush1.msra.mxu0 %v728
      %794 = vmatprep.subr.mxu0 0.0
      %795 = vmatpush1.msra.mxu0 0.0
      %796 = vmatprep.subr.mxu0 0.0
      %797 = vmatpush1.msra.mxu0 0.0
      %798 = vmatprep.subr.mxu0 0.0
      %799 = vmatpush1.msra.mxu0 0.0
      %800 = vmatprep.subr.mxu0 0.0
      %801 = vmatpush1.msra.mxu0 0.0
      %802 = vmatprep.subr.mxu0 0.0
      %803 = vmatpush1.msra.mxu0 0.0
      %804 = vmatprep.subr.mxu0 0.0
      %805 = vmatpush1.msra.mxu0 0.0
      %806 = vmatprep.subr.mxu0 0.0
      %807 = vmatpush1.msra.mxu0 0.0
      %808 = vmatprep.subr.mxu0 0.0
      %809 = vmatpush1.msra.mxu0 0.0
      %810 = vmatprep.subr.mxu0 0.0
      %811 = vmatpush1.msra.mxu0 0.0
      %812 = vmatprep.subr.mxu0 0.0
      %813 = vmatpush1.msra.mxu0 0.0
      %814 = vmatprep.subr.mxu0 0.0
      %815 = vmatpush1.msra.mxu0 0.0
      %816 = vmatprep.subr.mxu0 0.0
      %817 = vmatpush1.msra.mxu0 0.0
      %818 = vmatprep.subr.mxu0 0.0
      %819 = vmatpush1.msra.mxu0 0.0
      %820 = vmatprep.subr.mxu0 0.0
      %821 = vmatpush1.msra.mxu0 0.0
      %822 = vmatprep.subr.mxu0 0.0
      %823 = vmatpush1.msra.mxu0 0.0
      %824 = vmatprep.subr.mxu0 0.0
      %825 = vmatpush1.msra.mxu0 0.0
      %826 = vmatprep.subr.mxu0 0.0
      %827 = vmatpush1.msra.mxu0 0.0
      %828 = vmatprep.subr.mxu0 0.0
      %829 = vmatpush1.msra.mxu0 0.0
      %830 = vmatprep.subr.mxu0 0.0
      %831 = vmatpush1.msra.mxu0 0.0
      %832 = vmatprep.subr.mxu0 0.0
      %833 = vmatpush1.msra.mxu0 0.0
      %834 = vmatprep.subr.mxu0 0.0
      %835 = vmatpush1.msra.mxu0 0.0
      %836 = vmatprep.subr.mxu0 0.0
      %837 = vmatpush1.msra.mxu0 0.0
      %838 = vmatprep.subr.mxu0 0.0
      %839 = vmatpush1.msra.mxu0 0.0
      %840 = vmatprep.subr.mxu0 0.0
      %841 = vmatpush1.msra.mxu0 0.0
      %842 = vmatprep.mubr.f32.mxu0 0.0
      %843 = vmatmul.mubr.f32.gmra.mrb[0].mxu0 %v731
      %v844 = vpop.f32.mrb[0].mxu0
      %v845 = vadd.f32 0.0, %v844
      %v846 = vpop.f32.mrb[0].mxu0
      %847 = vmatprep.mubr.f32.mxu0 0.0
      %848 = vmatmul.mubr.f32.gmra.mrb[0].mxu0 %v734
      %v849 = vpop.f32.mrb[0].mxu0
      %v850 = vadd.f32 0.0, %v849
      %v851 = vpop.f32.mrb[0].mxu0
      %852 = vmatprep.mubr.f32.mxu0 0.0
      %853 = vmatmul.mubr.f32.gmra.mrb[0].mxu0 %v737
      %v854 = vpop.f32.mrb[0].mxu0
      %v855 = vadd.f32 0.0, %v854
      %v856 = vpop.f32.mrb[0].mxu0
      %857 = vmatprep.mubr.f32.mxu0 0.0
      %858 = vmatmul.mubr.f32.gmra.mrb[0].mxu0 %v740
      %v859 = vpop.f32.mrb[0].mxu0
      %v860 = vadd.f32 0.0, %v859
      %v861 = vpop.f32.mrb[0].mxu0
      %862 = vmatprep.mubr.f32.mxu0 0.0
      %863 = vmatmul.mubr.f32.gmra.mrb[0].mxu0 %v743
      %v864 = vpop.f32.mrb[0].mxu0
      %v865 = vadd.f32 0.0, %v864
      %v866 = vpop.f32.mrb[0].mxu0
      %867 = vmatprep.mubr.f32.mxu0 0.0
      %868 = vmatmul.mubr.f32.gmra.mrb[0].mxu0 %v746
      %v869 = vpop.f32.mrb[0].mxu0
      %v870 = vadd.f32 0.0, %v869
      %v871 = vpop.f32.mrb[0].mxu0
      %872 = vmatprep.mubr.f32.mxu0 0.0
      %873 = vmatmul.mubr.f32.gmra.mrb[0].mxu0 %v749
      %v874 = vpop.f32.mrb[0].mxu0
      %v875 = vadd.f32 0.0, %v874
      %v876 = vpop.f32.mrb[0].mxu0
      %877 = vmatprep.mubr.f32.mxu0 0.0
      %878 = vmatmul.mubr.f32.gmra.mrb[0].mxu0 %v752
      %v879 = vpop.f32.mrb[0].mxu0
      %v880 = vadd.f32 0.0, %v879
      %v881 = vpop.f32.mrb[0].mxu0
      %882 = vmatprep.mubr.f32.mxu0 0.0
      %883 = vmatmul.mubr.f32.gmra.mrb[0].mxu0 %v755
      %v884 = vpop.f32.mrb[0].mxu0
      %v885 = vadd.f32 0.0, %v884
      %v886 = vpop.f32.mrb[0].mxu0
      %887 = vmatprep.mubr.f32.mxu0 0.0
      %888 = vmatmul.mubr.f32.gmra.mrb[0].mxu0 %v758
      %v889 = vpop.f32.mrb[0].mxu0
      %v890 = vadd.f32 0.0, %v889
      %v891 = vpop.f32.mrb[0].mxu0
      %892 = vmatprep.mubr.f32.mxu0 0.0
      %893 = vmatmul.mubr.f32.gmra.mrb[0].mxu0 %v761
      %v894 = vpop.f32.mrb[0].mxu0
      %v895 = vadd.f32 0.0, %v894
      %v896 = vpop.f32.mrb[0].mxu0
      %897 = vmatprep.mubr.f32.mxu0 0.0
      %898 = vmatmul.mubr.f32.gmra.mrb[0].mxu0 %v764
      %v899 = vpop.f32.mrb[0].mxu0
      %v900 = vadd.f32 0.0, %v899
      %v901 = vpop.f32.mrb[0].mxu0
      %902 = vmatprep.mubr.f32.mxu0 0.0
      %903 = vmatmul.mubr.f32.gmra.mrb[0].mxu0 %v767
      %v904 = vpop.f32.mrb[0].mxu0
      %v905 = vadd.f32 0.0, %v904
      %v906 = vpop.f32.mrb[0].mxu0
      %907 = vmatprep.mubr.f32.mxu0 0.0
      %908 = vmatmul.mubr.f32.gmra.mrb[0].mxu0 %v770
      %v909 = vpop.f32.mrb[0].mxu0
      %v910 = vadd.f32 0.0, %v909
      %v911 = vpop.f32.mrb[0].mxu0
      %912 = vmatprep.mubr.f32.mxu0 0.0
      %913 = vmatmul.mubr.f32.gmra.mrb[0].mxu0 %v773
      %v914 = vpop.f32.mrb[0].mxu0
      %v915 = vadd.f32 0.0, %v914
      %v916 = vpop.f32.mrb[0].mxu0
      %917 = vmatprep.mubr.f32.mxu0 0.0
      %918 = vmatmul.mubr.f32.gmra.mrb[0].mxu0 %v776
      %v919 = vpop.f32.mrb[0].mxu0
      %v920 = vadd.f32 0.0, %v919
      %v921 = vpop.f32.mrb[0].mxu0
      %922 = vdwg.mxu0
      %v923 = vmax.f32 %v845, 0.0
      %v924 = vmax.f32 %v850, 0.0
      %v925 = vmax.f32 %v855, 0.0
      %v926 = vmax.f32 %v860, 0.0
      %v927 = vmax.f32 %v865, 0.0
      %v928 = vmax.f32 %v870, 0.0
      %v929 = vmax.f32 %v875, 0.0
      %v930 = vmax.f32 %v880, 0.0
      %v931 = vmax.f32 %v885, 0.0
      %v932 = vmax.f32 %v890, 0.0
      %v933 = vmax.f32 %v895, 0.0
      %v934 = vmax.f32 %v900, 0.0
      %v935 = vmax.f32 %v905, 0.0
      %v936 = vmax.f32 %v910, 0.0
      %v937 = vmax.f32 %v915, 0.0
      %v938 = vmax.f32 %v920, 0.0
      %s939 = scalar_lea.vmem %s2, 128
      %v940 = vld [vmem:[%s939] sm:$0xff]
      %v941 = vld [vmem:[%s939 + $0x8] sm:$0xff]
      %v942 = vld [vmem:[%s939 + $0x10] sm:$0xff]
      %v943 = vld [vmem:[%s939 + $0x18] sm:$0xff]
      %v944 = vld [vmem:[%s939 + $0x20] sm:$0xff]
      %v945 = vld [vmem:[%s939 + $0x28] sm:$0xff]
      %v946 = vld [vmem:[%s939 + $0x30] sm:$0xff]
      %v947 = vld [vmem:[%s939 + $0x38] sm:$0xff]
      %v949 = vsel %vm729, %v923, 0
      %v952 = vsel %vm729, %v924, 0
      %v955 = vsel %vm729, %v925, 0
      %v958 = vsel %vm729, %v926, 0
      %v961 = vsel %vm729, %v927, 0
      %v964 = vsel %vm729, %v928, 0
      %v967 = vsel %vm729, %v929, 0
      %v970 = vsel %vm729, %v930, 0
      %v973 = vsel %vm729, %v931, 0
      %v976 = vsel %vm729, %v932, 0
      %v979 = vsel %vm729, %v933, 0
      %v982 = vsel %vm729, %v934, 0
      %v985 = vsel %vm729, %v935, 0
      %v988 = vsel %vm729, %v936, 0
      %v991 = vsel %vm729, %v937, 0
      %v994 = vsel %vm729, %v938, 0
      %996 = vmatprep.subr.mxu0 0.0
      %997 = vmatpush1.msra.mxu0 %v940
      %998 = vmatprep.subr.mxu0 0.0
      %999 = vmatpush1.msra.mxu0 %v941
      %1000 = vmatprep.subr.mxu0 0.0
      %1001 = vmatpush1.msra.mxu0 %v942
      %1002 = vmatprep.subr.mxu0 0.0
      %1003 = vmatpush1.msra.mxu0 %v943
      %1004 = vmatprep.subr.mxu0 0.0
      %1005 = vmatpush1.msra.mxu0 %v944
      %1006 = vmatprep.subr.mxu0 0.0
      %1007 = vmatpush1.msra.mxu0 %v945
      %1008 = vmatprep.subr.mxu0 0.0
      %1009 = vmatpush1.msra.mxu0 %v946
      %1010 = vmatprep.subr.mxu0 0.0
      %1011 = vmatpush1.msra.mxu0 %v947
      %1012 = vmatprep.subr.mxu0 0.0
      %1013 = vmatpush1.msra.mxu0 0.0
      %1014 = vmatprep.subr.mxu0 0.0
      %1015 = vmatpush1.msra.mxu0 0.0
      %1016 = vmatprep.subr.mxu0 0.0
      %1017 = vmatpush1.msra.mxu0 0.0
      %1018 = vmatprep.subr.mxu0 0.0
      %1019 = vmatpush1.msra.mxu0 0.0
      %1020 = vmatprep.subr.mxu0 0.0
      %1021 = vmatpush1.msra.mxu0 0.0
      %1022 = vmatprep.subr.mxu0 0.0
      %1023 = vmatpush1.msra.mxu0 0.0
      %1024 = vmatprep.subr.mxu0 0.0
      %1025 = vmatpush1.msra.mxu0 0.0
      %1026 = vmatprep.subr.mxu0 0.0
      %1027 = vmatpush1.msra.mxu0 0.0
      %1028 = vmatprep.subr.mxu0 0.0
      %1029 = vmatpush1.msra.mxu0 0.0
      %1030 = vmatprep.subr.mxu0 0.0
      %1031 = vmatpush1.msra.mxu0 0.0
      %1032 = vmatprep.subr.mxu0 0.0
      %1033 = vmatpush1.msra.mxu0 0.0
      %1034 = vmatprep.subr.mxu0 0.0
      %1035 = vmatpush1.msra.mxu0 0.0
      %1036 = vmatprep.subr.mxu0 0.0
      %1037 = vmatpush1.msra.mxu0 0.0
      %1038 = vmatprep.subr.mxu0 0.0
      %1039 = vmatpush1.msra.mxu0 0.0
      %1040 = vmatprep.subr.mxu0 0.0
      %1041 = vmatpush1.msra.mxu0 0.0
      %1042 = vmatprep.subr.mxu0 0.0
      %1043 = vmatpush1.msra.mxu0 0.0
      %1044 = vmatprep.subr.mxu0 0.0
      %1045 = vmatpush1.msra.mxu0 0.0
      %1046 = vmatprep.subr.mxu0 0.0
      %1047 = vmatpush1.msra.mxu0 0.0
      %1048 = vmatprep.subr.mxu0 0.0
      %1049 = vmatpush1.msra.mxu0 0.0
      %1050 = vmatprep.subr.mxu0 0.0
      %1051 = vmatpush1.msra.mxu0 0.0
      %1052 = vmatprep.subr.mxu0 0.0
      %1053 = vmatpush1.msra.mxu0 0.0
      %1054 = vmatprep.subr.mxu0 0.0
      %1055 = vmatpush1.msra.mxu0 0.0
      %1056 = vmatprep.subr.mxu0 0.0
      %1057 = vmatpush1.msra.mxu0 0.0
      %1058 = vmatprep.subr.mxu0 0.0
      %1059 = vmatpush1.msra.mxu0 0.0
      %1060 = vmatprep.mubr.f32.mxu0 0.0
      %1061 = vmatmul.mubr.f32.gmra.mrb[0].mxu0 %v949
      %v1062 = vpop.f32.mrb[0].mxu0
      %v1063 = vadd.f32 0.0, %v1062
      %v1064 = vpop.f32.mrb[0].mxu0
      %1065 = vmatprep.mubr.f32.mxu0 0.0
      %1066 = vmatmul.mubr.f32.gmra.mrb[0].mxu0 %v952
      %v1067 = vpop.f32.mrb[0].mxu0
      %v1068 = vadd.f32 0.0, %v1067
      %v1069 = vpop.f32.mrb[0].mxu0
      %1070 = vmatprep.mubr.f32.mxu0 0.0
      %1071 = vmatmul.mubr.f32.gmra.mrb[0].mxu0 %v955
      %v1072 = vpop.f32.mrb[0].mxu0
      %v1073 = vadd.f32 0.0, %v1072
      %v1074 = vpop.f32.mrb[0].mxu0
      %1075 = vmatprep.mubr.f32.mxu0 0.0
      %1076 = vmatmul.mubr.f32.gmra.mrb[0].mxu0 %v958
      %v1077 = vpop.f32.mrb[0].mxu0
      %v1078 = vadd.f32 0.0, %v1077
      %v1079 = vpop.f32.mrb[0].mxu0
      %1080 = vmatprep.mubr.f32.mxu0 0.0
      %1081 = vmatmul.mubr.f32.gmra.mrb[0].mxu0 %v961
      %v1082 = vpop.f32.mrb[0].mxu0
      %v1083 = vadd.f32 0.0, %v1082
      %v1084 = vpop.f32.mrb[0].mxu0
      %1085 = vmatprep.mubr.f32.mxu0 0.0
      %1086 = vmatmul.mubr.f32.gmra.mrb[0].mxu0 %v964
      %v1087 = vpop.f32.mrb[0].mxu0
      %v1088 = vadd.f32 0.0, %v1087
      %v1089 = vpop.f32.mrb[0].mxu0
      %1090 = vmatprep.mubr.f32.mxu0 0.0
      %1091 = vmatmul.mubr.f32.gmra.mrb[0].mxu0 %v967
      %v1092 = vpop.f32.mrb[0].mxu0
      %v1093 = vadd.f32 0.0, %v1092
      %v1094 = vpop.f32.mrb[0].mxu0
      %1095 = vmatprep.mubr.f32.mxu0 0.0
      %1096 = vmatmul.mubr.f32.gmra.mrb[0].mxu0 %v970
      %v1097 = vpop.f32.mrb[0].mxu0
      %v1098 = vadd.f32 0.0, %v1097
      %v1099 = vpop.f32.mrb[0].mxu0
      %1100 = vmatprep.mubr.f32.mxu0 0.0
      %1101 = vmatmul.mubr.f32.gmra.mrb[0].mxu0 %v973
      %v1102 = vpop.f32.mrb[0].mxu0
      %v1103 = vadd.f32 0.0, %v1102
      %v1104 = vpop.f32.mrb[0].mxu0
      %1105 = vmatprep.mubr.f32.mxu0 0.0
      %1106 = vmatmul.mubr.f32.gmra.mrb[0].mxu0 %v976
      %v1107 = vpop.f32.mrb[0].mxu0
      %v1108 = vadd.f32 0.0, %v1107
      %v1109 = vpop.f32.mrb[0].mxu0
      %1110 = vmatprep.mubr.f32.mxu0 0.0
      %1111 = vmatmul.mubr.f32.gmra.mrb[0].mxu0 %v979
      %v1112 = vpop.f32.mrb[0].mxu0
      %v1113 = vadd.f32 0.0, %v1112
      %v1114 = vpop.f32.mrb[0].mxu0
      %1115 = vmatprep.mubr.f32.mxu0 0.0
      %1116 = vmatmul.mubr.f32.gmra.mrb[0].mxu0 %v982
      %v1117 = vpop.f32.mrb[0].mxu0
      %v1118 = vadd.f32 0.0, %v1117
      %v1119 = vpop.f32.mrb[0].mxu0
      %1120 = vmatprep.mubr.f32.mxu0 0.0
      %1121 = vmatmul.mubr.f32.gmra.mrb[0].mxu0 %v985
      %v1122 = vpop.f32.mrb[0].mxu0
      %v1123 = vadd.f32 0.0, %v1122
      %v1124 = vpop.f32.mrb[0].mxu0
      %1125 = vmatprep.mubr.f32.mxu0 0.0
      %1126 = vmatmul.mubr.f32.gmra.mrb[0].mxu0 %v988
      %v1127 = vpop.f32.mrb[0].mxu0
      %v1128 = vadd.f32 0.0, %v1127
      %v1129 = vpop.f32.mrb[0].mxu0
      %1130 = vmatprep.mubr.f32.mxu0 0.0
      %1131 = vmatmul.mubr.f32.gmra.mrb[0].mxu0 %v991
      %v1132 = vpop.f32.mrb[0].mxu0
      %v1133 = vadd.f32 0.0, %v1132
      %v1134 = vpop.f32.mrb[0].mxu0
      %1135 = vmatprep.mubr.f32.mxu0 0.0
      %1136 = vmatmul.mubr.f32.gmra.mrb[0].mxu0 %v994
      %v1137 = vpop.f32.mrb[0].mxu0
      %v1138 = vadd.f32 0.0, %v1137
      %v1139 = vpop.f32.mrb[0].mxu0
      %1140 = vdwg.mxu0
      %v1141 = vadd.f32 %v277, %v1063
      %v1142 = vadd.f32 %v278, %v1068
      %v1143 = vadd.f32 %v279, %v1073
      %v1144 = vadd.f32 %v280, %v1078
      %v1145 = vadd.f32 %v281, %v1083
      %v1146 = vadd.f32 %v282, %v1088
      %v1147 = vadd.f32 %v283, %v1093
      %v1148 = vadd.f32 %v284, %v1098
      %v1149 = vadd.f32 %v285, %v1103
      %v1150 = vadd.f32 %v286, %v1108
      %v1151 = vadd.f32 %v287, %v1113
      %v1152 = vadd.f32 %v288, %v1118
      %v1153 = vadd.f32 %v289, %v1123
      %v1154 = vadd.f32 %v290, %v1128
      %v1155 = vadd.f32 %v291, %v1133
      %v1156 = vadd.f32 %v292, %v1138
      %v1157 = vmax.f32 %v1141, 0.0
      %v1158 = vmax.f32 %v1142, 0.0
      %v1159 = vmax.f32 %v1143, 0.0
      %v1160 = vmax.f32 %v1144, 0.0
      %v1161 = vmax.f32 %v1145, 0.0
      %v1162 = vmax.f32 %v1146, 0.0
      %v1163 = vmax.f32 %v1147, 0.0
      %v1164 = vmax.f32 %v1148, 0.0
      %v1165 = vmax.f32 %v1149, 0.0
      %v1166 = vmax.f32 %v1150, 0.0
      %v1167 = vmax.f32 %v1151, 0.0
      %v1168 = vmax.f32 %v1152, 0.0
      %v1169 = vmax.f32 %v1153, 0.0
      %v1170 = vmax.f32 %v1154, 0.0
      %v1171 = vmax.f32 %v1155, 0.0
      %v1172 = vmax.f32 %v1156, 0.0
      %1189 = vrot.lane.b32.xlu0 %v1063, 96
      %v1190 = vpop.permute.xlu0 %1189
      %1191 = vrot.lane.b32.xlu0 %v1068, 96
      %v1192 = vpop.permute.xlu0 %1191
      %1193 = vrot.lane.b32.xlu0 %v1073, 96
      %v1194 = vpop.permute.xlu0 %1193
      %1195 = vrot.lane.b32.xlu0 %v1078, 96
      %v1196 = vpop.permute.xlu0 %1195
      %1197 = vrot.lane.b32.xlu0 %v1083, 96
      %v1198 = vpop.permute.xlu0 %1197
      %1199 = vrot.lane.b32.xlu0 %v1088, 96
      %v1200 = vpop.permute.xlu0 %1199
      %1201 = vrot.lane.b32.xlu0 %v1093, 96
      %v1202 = vpop.permute.xlu0 %1201
      %1203 = vrot.lane.b32.xlu0 %v1098, 96
      %v1204 = vpop.permute.xlu0 %1203
      %1205 = vrot.lane.b32.xlu0 %v1103, 96
      %v1206 = vpop.permute.xlu0 %1205
      %1207 = vrot.lane.b32.xlu0 %v1108, 96
      %v1208 = vpop.permute.xlu0 %1207
      %1209 = vrot.lane.b32.xlu0 %v1113, 96
      %v1210 = vpop.permute.xlu0 %1209
      %1211 = vrot.lane.b32.xlu0 %v1118, 96
      %v1212 = vpop.permute.xlu0 %1211
      %1213 = vrot.lane.b32.xlu0 %v1123, 96
      %v1214 = vpop.permute.xlu0 %1213
      %1215 = vrot.lane.b32.xlu0 %v1128, 96
      %v1216 = vpop.permute.xlu0 %1215
      %1217 = vrot.lane.b32.xlu0 %v1133, 96
      %v1218 = vpop.permute.xlu0 %1217
      %1219 = vrot.lane.b32.xlu0 %v1138, 96
      %v1220 = vpop.permute.xlu0 %1219
      %v1237 = vadd.f32 %v293, %v1190
      %v1238 = vadd.f32 %v294, %v1192
      %v1239 = vadd.f32 %v295, %v1194
      %v1240 = vadd.f32 %v296, %v1196
      %v1241 = vadd.f32 %v297, %v1198
      %v1242 = vadd.f32 %v298, %v1200
      %v1243 = vadd.f32 %v299, %v1202
      %v1244 = vadd.f32 %v300, %v1204
      %v1245 = vadd.f32 %v301, %v1206
      %v1246 = vadd.f32 %v302, %v1208
      %v1247 = vadd.f32 %v303, %v1210
      %v1248 = vadd.f32 %v304, %v1212
      %v1249 = vadd.f32 %v305, %v1214
      %v1250 = vadd.f32 %v306, %v1216
      %v1251 = vadd.f32 %v307, %v1218
      %v1252 = vadd.f32 %v308, %v1220
      %v1253 = vmax.f32 %v1237, 0.0
      %v1254 = vmax.f32 %v1238, 0.0
      %v1255 = vmax.f32 %v1239, 0.0
      %v1256 = vmax.f32 %v1240, 0.0
      %v1257 = vmax.f32 %v1241, 0.0
      %v1258 = vmax.f32 %v1242, 0.0
      %v1259 = vmax.f32 %v1243, 0.0
      %v1260 = vmax.f32 %v1244, 0.0
      %v1261 = vmax.f32 %v1245, 0.0
      %v1262 = vmax.f32 %v1246, 0.0
      %v1263 = vmax.f32 %v1247, 0.0
      %v1264 = vmax.f32 %v1248, 0.0
      %v1265 = vmax.f32 %v1249, 0.0
      %v1266 = vmax.f32 %v1250, 0.0
      %v1267 = vmax.f32 %v1251, 0.0
      %v1268 = vmax.f32 %v1252, 0.0
      %v1269 = vld [vmem:[%s3] sm:$0xff]
      %v1270 = vld [vmem:[%s3 + $0x8] sm:$0xff]
      %v1271 = vld [vmem:[%s3 + $0x10] sm:$0xff]
      %v1272 = vld [vmem:[%s3 + $0x18] sm:$0xff]
      %v1273 = vld [vmem:[%s3 + $0x20] sm:$0xff]
      %v1274 = vld [vmem:[%s3 + $0x28] sm:$0xff]
      %v1275 = vld [vmem:[%s3 + $0x30] sm:$0xff]
      %v1276 = vld [vmem:[%s3 + $0x38] sm:$0xff]
      %v1278 = vsel %vm317, %v1253, 0
      %v1281 = vsel %vm317, %v1254, 0
      %v1284 = vsel %vm317, %v1255, 0
      %v1287 = vsel %vm317, %v1256, 0
      %v1290 = vsel %vm317, %v1257, 0
      %v1293 = vsel %vm317, %v1258, 0
      %v1296 = vsel %vm317, %v1259, 0
      %v1299 = vsel %vm317, %v1260, 0
      %v1302 = vsel %vm317, %v1261, 0
      %v1305 = vsel %vm317, %v1262, 0
      %v1308 = vsel %vm317, %v1263, 0
      %v1311 = vsel %vm317, %v1264, 0
      %v1314 = vsel %vm317, %v1265, 0
      %v1317 = vsel %vm317, %v1266, 0
      %v1320 = vsel %vm317, %v1267, 0
      %v1323 = vsel %vm317, %v1268, 0
      %1325 = vmatprep.subr.mxu0 0.0
      %1326 = vmatpush1.msra.mxu0 %v1273
      %1327 = vmatprep.subr.mxu0 0.0
      %1328 = vmatpush1.msra.mxu0 %v1274
      %1329 = vmatprep.subr.mxu0 0.0
      %1330 = vmatpush1.msra.mxu0 %v1275
      %1331 = vmatprep.subr.mxu0 0.0
      %1332 = vmatpush1.msra.mxu0 %v1276
      %1333 = vmatprep.subr.mxu0 0.0
      %1334 = vmatpush1.msra.mxu0 0.0
      %1335 = vmatprep.subr.mxu0 0.0
      %1336 = vmatpush1.msra.mxu0 0.0
      %1337 = vmatprep.subr.mxu0 0.0
      %1338 = vmatpush1.msra.mxu0 0.0
      %1339 = vmatprep.subr.mxu0 0.0
      %1340 = vmatpush1.msra.mxu0 0.0
      %1341 = vmatprep.subr.mxu0 0.0
      %1342 = vmatpush1.msra.mxu0 0.0
      %1343 = vmatprep.subr.mxu0 0.0
      %1344 = vmatpush1.msra.mxu0 0.0
      %1345 = vmatprep.subr.mxu0 0.0
      %1346 = vmatpush1.msra.mxu0 0.0
      %1347 = vmatprep.subr.mxu0 0.0
      %1348 = vmatpush1.msra.mxu0 0.0
      %1349 = vmatprep.subr.mxu0 0.0
      %1350 = vmatpush1.msra.mxu0 0.0
      %1351 = vmatprep.subr.mxu0 0.0
      %1352 = vmatpush1.msra.mxu0 0.0
      %1353 = vmatprep.subr.mxu0 0.0
      %1354 = vmatpush1.msra.mxu0 0.0
      %1355 = vmatprep.subr.mxu0 0.0
      %1356 = vmatpush1.msra.mxu0 0.0
      %1357 = vmatprep.subr.mxu0 0.0
      %1358 = vmatpush1.msra.mxu0 0.0
      %1359 = vmatprep.subr.mxu0 0.0
      %1360 = vmatpush1.msra.mxu0 0.0
      %1361 = vmatprep.subr.mxu0 0.0
      %1362 = vmatpush1.msra.mxu0 0.0
      %1363 = vmatprep.subr.mxu0 0.0
      %1364 = vmatpush1.msra.mxu0 0.0
      %1365 = vmatprep.subr.mxu0 0.0
      %1366 = vmatpush1.msra.mxu0 0.0
      %1367 = vmatprep.subr.mxu0 0.0
      %1368 = vmatpush1.msra.mxu0 0.0
      %1369 = vmatprep.subr.mxu0 0.0
      %1370 = vmatpush1.msra.mxu0 0.0
      %1371 = vmatprep.subr.mxu0 0.0
      %1372 = vmatpush1.msra.mxu0 0.0
      %1373 = vmatprep.subr.mxu0 0.0
      %1374 = vmatpush1.msra.mxu0 0.0
      %1375 = vmatprep.subr.mxu0 0.0
      %1376 = vmatpush1.msra.mxu0 0.0
      %1377 = vmatprep.subr.mxu0 0.0
      %1378 = vmatpush1.msra.mxu0 0.0
      %1379 = vmatprep.subr.mxu0 0.0
      %1380 = vmatpush1.msra.mxu0 0.0
      %1381 = vmatprep.subr.mxu0 0.0
      %1382 = vmatpush1.msra.mxu0 0.0
      %1383 = vmatprep.subr.mxu0 0.0
      %1384 = vmatpush1.msra.mxu0 0.0
      %1385 = vmatprep.subr.mxu0 0.0
      %1386 = vmatpush1.msra.mxu0 0.0
      %1387 = vmatprep.subr.mxu0 0.0
      %1388 = vmatpush1.msra.mxu0 0.0
      %1389 = vmatprep.mubr.f32.mxu0 0.0
      %1390 = vmatmul.mubr.f32.gmra.mrb[0].mxu0 %v1278
      %v1391 = vpop.f32.mrb[0].mxu0
      %v1392 = vadd.f32 0.0, %v1391
      %v1393 = vpop.f32.mrb[0].mxu0
      %1394 = vmatprep.mubr.f32.mxu0 0.0
      %1395 = vmatmul.mubr.f32.gmra.mrb[0].mxu0 %v1281
      %v1396 = vpop.f32.mrb[0].mxu0
      %v1397 = vadd.f32 0.0, %v1396
      %v1398 = vpop.f32.mrb[0].mxu0
      %1399 = vmatprep.mubr.f32.mxu0 0.0
      %1400 = vmatmul.mubr.f32.gmra.mrb[0].mxu0 %v1284
      %v1401 = vpop.f32.mrb[0].mxu0
      %v1402 = vadd.f32 0.0, %v1401
      %v1403 = vpop.f32.mrb[0].mxu0
      %1404 = vmatprep.mubr.f32.mxu0 0.0
      %1405 = vmatmul.mubr.f32.gmra.mrb[0].mxu0 %v1287
      %v1406 = vpop.f32.mrb[0].mxu0
      %v1407 = vadd.f32 0.0, %v1406
      %v1408 = vpop.f32.mrb[0].mxu0
      %1409 = vmatprep.mubr.f32.mxu0 0.0
      %1410 = vmatmul.mubr.f32.gmra.mrb[0].mxu0 %v1290
      %v1411 = vpop.f32.mrb[0].mxu0
      %v1412 = vadd.f32 0.0, %v1411
      %v1413 = vpop.f32.mrb[0].mxu0
      %1414 = vmatprep.mubr.f32.mxu0 0.0
      %1415 = vmatmul.mubr.f32.gmra.mrb[0].mxu0 %v1293
      %v1416 = vpop.f32.mrb[0].mxu0
      %v1417 = vadd.f32 0.0, %v1416
      %v1418 = vpop.f32.mrb[0].mxu0
      %1419 = vmatprep.mubr.f32.mxu0 0.0
      %1420 = vmatmul.mubr.f32.gmra.mrb[0].mxu0 %v1296
      %v1421 = vpop.f32.mrb[0].mxu0
      %v1422 = vadd.f32 0.0, %v1421
      %v1423 = vpop.f32.mrb[0].mxu0
      %1424 = vmatprep.mubr.f32.mxu0 0.0
      %1425 = vmatmul.mubr.f32.gmra.mrb[0].mxu0 %v1299
      %v1426 = vpop.f32.mrb[0].mxu0
      %v1427 = vadd.f32 0.0, %v1426
      %v1428 = vpop.f32.mrb[0].mxu0
      %1429 = vmatprep.mubr.f32.mxu0 0.0
      %1430 = vmatmul.mubr.f32.gmra.mrb[0].mxu0 %v1302
      %v1431 = vpop.f32.mrb[0].mxu0
      %v1432 = vadd.f32 0.0, %v1431
      %v1433 = vpop.f32.mrb[0].mxu0
      %1434 = vmatprep.mubr.f32.mxu0 0.0
      %1435 = vmatmul.mubr.f32.gmra.mrb[0].mxu0 %v1305
      %v1436 = vpop.f32.mrb[0].mxu0
      %v1437 = vadd.f32 0.0, %v1436
      %v1438 = vpop.f32.mrb[0].mxu0
      %1439 = vmatprep.mubr.f32.mxu0 0.0
      %1440 = vmatmul.mubr.f32.gmra.mrb[0].mxu0 %v1308
      %v1441 = vpop.f32.mrb[0].mxu0
      %v1442 = vadd.f32 0.0, %v1441
      %v1443 = vpop.f32.mrb[0].mxu0
      %1444 = vmatprep.mubr.f32.mxu0 0.0
      %1445 = vmatmul.mubr.f32.gmra.mrb[0].mxu0 %v1311
      %v1446 = vpop.f32.mrb[0].mxu0
      %v1447 = vadd.f32 0.0, %v1446
      %v1448 = vpop.f32.mrb[0].mxu0
      %1449 = vmatprep.mubr.f32.mxu0 0.0
      %1450 = vmatmul.mubr.f32.gmra.mrb[0].mxu0 %v1314
      %v1451 = vpop.f32.mrb[0].mxu0
      %v1452 = vadd.f32 0.0, %v1451
      %v1453 = vpop.f32.mrb[0].mxu0
      %1454 = vmatprep.mubr.f32.mxu0 0.0
      %1455 = vmatmul.mubr.f32.gmra.mrb[0].mxu0 %v1317
      %v1456 = vpop.f32.mrb[0].mxu0
      %v1457 = vadd.f32 0.0, %v1456
      %v1458 = vpop.f32.mrb[0].mxu0
      %1459 = vmatprep.mubr.f32.mxu0 0.0
      %1460 = vmatmul.mubr.f32.gmra.mrb[0].mxu0 %v1320
      %v1461 = vpop.f32.mrb[0].mxu0
      %v1462 = vadd.f32 0.0, %v1461
      %v1463 = vpop.f32.mrb[0].mxu0
      %1464 = vmatprep.mubr.f32.mxu0 0.0
      %1465 = vmatmul.mubr.f32.gmra.mrb[0].mxu0 %v1323
      %v1466 = vpop.f32.mrb[0].mxu0
      %v1467 = vadd.f32 0.0, %v1466
      %v1468 = vpop.f32.mrb[0].mxu0
      %1469 = vdwg.mxu0
      %v1471 = vsel %vm317, %v1157, 0
      %v1474 = vsel %vm317, %v1158, 0
      %v1477 = vsel %vm317, %v1159, 0
      %v1480 = vsel %vm317, %v1160, 0
      %v1483 = vsel %vm317, %v1161, 0
      %v1486 = vsel %vm317, %v1162, 0
      %v1489 = vsel %vm317, %v1163, 0
      %v1492 = vsel %vm317, %v1164, 0
      %v1495 = vsel %vm317, %v1165, 0
      %v1498 = vsel %vm317, %v1166, 0
      %v1501 = vsel %vm317, %v1167, 0
      %v1504 = vsel %vm317, %v1168, 0
      %v1507 = vsel %vm317, %v1169, 0
      %v1510 = vsel %vm317, %v1170, 0
      %v1513 = vsel %vm317, %v1171, 0
      %v1516 = vsel %vm317, %v1172, 0
      %1518 = vmatprep.subr.mxu0 0.0
      %1519 = vmatpush1.msra.mxu0 %v1269
      %1520 = vmatprep.subr.mxu0 0.0
      %1521 = vmatpush1.msra.mxu0 %v1270
      %1522 = vmatprep.subr.mxu0 0.0
      %1523 = vmatpush1.msra.mxu0 %v1271
      %1524 = vmatprep.subr.mxu0 0.0
      %1525 = vmatpush1.msra.mxu0 %v1272
      %1526 = vmatprep.subr.mxu0 0.0
      %1527 = vmatpush1.msra.mxu0 0.0
      %1528 = vmatprep.subr.mxu0 0.0
      %1529 = vmatpush1.msra.mxu0 0.0
      %1530 = vmatprep.subr.mxu0 0.0
      %1531 = vmatpush1.msra.mxu0 0.0
      %1532 = vmatprep.subr.mxu0 0.0
      %1533 = vmatpush1.msra.mxu0 0.0
      %1534 = vmatprep.subr.mxu0 0.0
      %1535 = vmatpush1.msra.mxu0 0.0
      %1536 = vmatprep.subr.mxu0 0.0
      %1537 = vmatpush1.msra.mxu0 0.0
      %1538 = vmatprep.subr.mxu0 0.0
      %1539 = vmatpush1.msra.mxu0 0.0
      %1540 = vmatprep.subr.mxu0 0.0
      %1541 = vmatpush1.msra.mxu0 0.0
      %1542 = vmatprep.subr.mxu0 0.0
      %1543 = vmatpush1.msra.mxu0 0.0
      %1544 = vmatprep.subr.mxu0 0.0
      %1545 = vmatpush1.msra.mxu0 0.0
      %1546 = vmatprep.subr.mxu0 0.0
      %1547 = vmatpush1.msra.mxu0 0.0
      %1548 = vmatprep.subr.mxu0 0.0
      %1549 = vmatpush1.msra.mxu0 0.0
      %1550 = vmatprep.subr.mxu0 0.0
      %1551 = vmatpush1.msra.mxu0 0.0
      %1552 = vmatprep.subr.mxu0 0.0
      %1553 = vmatpush1.msra.mxu0 0.0
      %1554 = vmatprep.subr.mxu0 0.0
      %1555 = vmatpush1.msra.mxu0 0.0
      %1556 = vmatprep.subr.mxu0 0.0
      %1557 = vmatpush1.msra.mxu0 0.0
      %1558 = vmatprep.subr.mxu0 0.0
      %1559 = vmatpush1.msra.mxu0 0.0
      %1560 = vmatprep.subr.mxu0 0.0
      %1561 = vmatpush1.msra.mxu0 0.0
      %1562 = vmatprep.subr.mxu0 0.0
      %1563 = vmatpush1.msra.mxu0 0.0
      %1564 = vmatprep.subr.mxu0 0.0
      %1565 = vmatpush1.msra.mxu0 0.0
      %1566 = vmatprep.subr.mxu0 0.0
      %1567 = vmatpush1.msra.mxu0 0.0
      %1568 = vmatprep.subr.mxu0 0.0
      %1569 = vmatpush1.msra.mxu0 0.0
      %1570 = vmatprep.subr.mxu0 0.0
      %1571 = vmatpush1.msra.mxu0 0.0
      %1572 = vmatprep.subr.mxu0 0.0
      %1573 = vmatpush1.msra.mxu0 0.0
      %1574 = vmatprep.subr.mxu0 0.0
      %1575 = vmatpush1.msra.mxu0 0.0
      %1576 = vmatprep.subr.mxu0 0.0
      %1577 = vmatpush1.msra.mxu0 0.0
      %1578 = vmatprep.subr.mxu0 0.0
      %1579 = vmatpush1.msra.mxu0 0.0
      %1580 = vmatprep.subr.mxu0 0.0
      %1581 = vmatpush1.msra.mxu0 0.0
      %1582 = vmatprep.mubr.f32.mxu0 0.0
      %1583 = vmatmul.mubr.f32.gmra.mrb[0].mxu0 %v1471
      %v1584 = vpop.f32.mrb[0].mxu0
      %v1585 = vadd.f32 %v1392, %v1584
      %v1586 = vpop.f32.mrb[0].mxu0
      %1587 = vmatprep.mubr.f32.mxu0 0.0
      %1588 = vmatmul.mubr.f32.gmra.mrb[0].mxu0 %v1474
      %v1589 = vpop.f32.mrb[0].mxu0
      %v1590 = vadd.f32 %v1397, %v1589
      %v1591 = vpop.f32.mrb[0].mxu0
      %1592 = vmatprep.mubr.f32.mxu0 0.0
      %1593 = vmatmul.mubr.f32.gmra.mrb[0].mxu0 %v1477
      %v1594 = vpop.f32.mrb[0].mxu0
      %v1595 = vadd.f32 %v1402, %v1594
      %v1596 = vpop.f32.mrb[0].mxu0
      %1597 = vmatprep.mubr.f32.mxu0 0.0
      %1598 = vmatmul.mubr.f32.gmra.mrb[0].mxu0 %v1480
      %v1599 = vpop.f32.mrb[0].mxu0
      %v1600 = vadd.f32 %v1407, %v1599
      %v1601 = vpop.f32.mrb[0].mxu0
      %1602 = vmatprep.mubr.f32.mxu0 0.0
      %1603 = vmatmul.mubr.f32.gmra.mrb[0].mxu0 %v1483
      %v1604 = vpop.f32.mrb[0].mxu0
      %v1605 = vadd.f32 %v1412, %v1604
      %v1606 = vpop.f32.mrb[0].mxu0
      %1607 = vmatprep.mubr.f32.mxu0 0.0
      %1608 = vmatmul.mubr.f32.gmra.mrb[0].mxu0 %v1486
      %v1609 = vpop.f32.mrb[0].mxu0
      %v1610 = vadd.f32 %v1417, %v1609
      %v1611 = vpop.f32.mrb[0].mxu0
      %1612 = vmatprep.mubr.f32.mxu0 0.0
      %1613 = vmatmul.mubr.f32.gmra.mrb[0].mxu0 %v1489
      %v1614 = vpop.f32.mrb[0].mxu0
      %v1615 = vadd.f32 %v1422, %v1614
      %v1616 = vpop.f32.mrb[0].mxu0
      %1617 = vmatprep.mubr.f32.mxu0 0.0
      %1618 = vmatmul.mubr.f32.gmra.mrb[0].mxu0 %v1492
      %v1619 = vpop.f32.mrb[0].mxu0
      %v1620 = vadd.f32 %v1427, %v1619
      %v1621 = vpop.f32.mrb[0].mxu0
      %1622 = vmatprep.mubr.f32.mxu0 0.0
      %1623 = vmatmul.mubr.f32.gmra.mrb[0].mxu0 %v1495
      %v1624 = vpop.f32.mrb[0].mxu0
      %v1625 = vadd.f32 %v1432, %v1624
      %v1626 = vpop.f32.mrb[0].mxu0
      %1627 = vmatprep.mubr.f32.mxu0 0.0
      %1628 = vmatmul.mubr.f32.gmra.mrb[0].mxu0 %v1498
      %v1629 = vpop.f32.mrb[0].mxu0
      %v1630 = vadd.f32 %v1437, %v1629
      %v1631 = vpop.f32.mrb[0].mxu0
      %1632 = vmatprep.mubr.f32.mxu0 0.0
      %1633 = vmatmul.mubr.f32.gmra.mrb[0].mxu0 %v1501
      %v1634 = vpop.f32.mrb[0].mxu0
      %v1635 = vadd.f32 %v1442, %v1634
      %v1636 = vpop.f32.mrb[0].mxu0
      %1637 = vmatprep.mubr.f32.mxu0 0.0
      %1638 = vmatmul.mubr.f32.gmra.mrb[0].mxu0 %v1504
      %v1639 = vpop.f32.mrb[0].mxu0
      %v1640 = vadd.f32 %v1447, %v1639
      %v1641 = vpop.f32.mrb[0].mxu0
      %1642 = vmatprep.mubr.f32.mxu0 0.0
      %1643 = vmatmul.mubr.f32.gmra.mrb[0].mxu0 %v1507
      %v1644 = vpop.f32.mrb[0].mxu0
      %v1645 = vadd.f32 %v1452, %v1644
      %v1646 = vpop.f32.mrb[0].mxu0
      %1647 = vmatprep.mubr.f32.mxu0 0.0
      %1648 = vmatmul.mubr.f32.gmra.mrb[0].mxu0 %v1510
      %v1649 = vpop.f32.mrb[0].mxu0
      %v1650 = vadd.f32 %v1457, %v1649
      %v1651 = vpop.f32.mrb[0].mxu0
      %1652 = vmatprep.mubr.f32.mxu0 0.0
      %1653 = vmatmul.mubr.f32.gmra.mrb[0].mxu0 %v1513
      %v1654 = vpop.f32.mrb[0].mxu0
      %v1655 = vadd.f32 %v1462, %v1654
      %v1656 = vpop.f32.mrb[0].mxu0
      %1657 = vmatprep.mubr.f32.mxu0 0.0
      %1658 = vmatmul.mubr.f32.gmra.mrb[0].mxu0 %v1516
      %v1659 = vpop.f32.mrb[0].mxu0
      %v1660 = vadd.f32 %v1467, %v1659
      %v1661 = vpop.f32.mrb[0].mxu0
      %1662 = vdwg.mxu0
      %v1663 = vmax.f32 %v1585, 0.0
      %v1664 = vmax.f32 %v1590, 0.0
      %v1665 = vmax.f32 %v1595, 0.0
      %v1666 = vmax.f32 %v1600, 0.0
      %v1667 = vmax.f32 %v1605, 0.0
      %v1668 = vmax.f32 %v1610, 0.0
      %v1669 = vmax.f32 %v1615, 0.0
      %v1670 = vmax.f32 %v1620, 0.0
      %v1671 = vmax.f32 %v1625, 0.0
      %v1672 = vmax.f32 %v1630, 0.0
      %v1673 = vmax.f32 %v1635, 0.0
      %v1674 = vmax.f32 %v1640, 0.0
      %v1675 = vmax.f32 %v1645, 0.0
      %v1676 = vmax.f32 %v1650, 0.0
      %v1677 = vmax.f32 %v1655, 0.0
      %v1678 = vmax.f32 %v1660, 0.0
      %v1679 = vld [vmem:[%s4] sm:$0xff]
      %v1680 = vld [vmem:[%s4 + $0x8] sm:$0xff]
      %v1681 = vld [vmem:[%s4 + $0x10] sm:$0xff]
      %v1682 = vld [vmem:[%s4 + $0x18] sm:$0xff]
      %v1684 = vsel %vm317, %v1663, 0
      %v1687 = vsel %vm317, %v1664, 0
      %v1690 = vsel %vm317, %v1665, 0
      %v1693 = vsel %vm317, %v1666, 0
      %v1696 = vsel %vm317, %v1667, 0
      %v1699 = vsel %vm317, %v1668, 0
      %v1702 = vsel %vm317, %v1669, 0
      %v1705 = vsel %vm317, %v1670, 0
      %v1708 = vsel %vm317, %v1671, 0
      %v1711 = vsel %vm317, %v1672, 0
      %v1714 = vsel %vm317, %v1673, 0
      %v1717 = vsel %vm317, %v1674, 0
      %v1720 = vsel %vm317, %v1675, 0
      %v1723 = vsel %vm317, %v1676, 0
      %v1726 = vsel %vm317, %v1677, 0
      %v1729 = vsel %vm317, %v1678, 0
      %1731 = vmatprep.subr.mxu0 0.0
      %1732 = vmatpush1.msra.mxu0 %v1679
      %1733 = vmatprep.subr.mxu0 0.0
      %1734 = vmatpush1.msra.mxu0 %v1680
      %1735 = vmatprep.subr.mxu0 0.0
      %1736 = vmatpush1.msra.mxu0 %v1681
      %1737 = vmatprep.subr.mxu0 0.0
      %1738 = vmatpush1.msra.mxu0 %v1682
      %1739 = vmatprep.subr.mxu0 0.0
      %1740 = vmatpush1.msra.mxu0 0.0
      %1741 = vmatprep.subr.mxu0 0.0
      %1742 = vmatpush1.msra.mxu0 0.0
      %1743 = vmatprep.subr.mxu0 0.0
      %1744 = vmatpush1.msra.mxu0 0.0
      %1745 = vmatprep.subr.mxu0 0.0
      %1746 = vmatpush1.msra.mxu0 0.0
      %1747 = vmatprep.subr.mxu0 0.0
      %1748 = vmatpush1.msra.mxu0 0.0
      %1749 = vmatprep.subr.mxu0 0.0
      %1750 = vmatpush1.msra.mxu0 0.0
      %1751 = vmatprep.subr.mxu0 0.0
      %1752 = vmatpush1.msra.mxu0 0.0
      %1753 = vmatprep.subr.mxu0 0.0
      %1754 = vmatpush1.msra.mxu0 0.0
      %1755 = vmatprep.subr.mxu0 0.0
      %1756 = vmatpush1.msra.mxu0 0.0
      %1757 = vmatprep.subr.mxu0 0.0
      %1758 = vmatpush1.msra.mxu0 0.0
      %1759 = vmatprep.subr.mxu0 0.0
      %1760 = vmatpush1.msra.mxu0 0.0
      %1761 = vmatprep.subr.mxu0 0.0
      %1762 = vmatpush1.msra.mxu0 0.0
      %1763 = vmatprep.subr.mxu0 0.0
      %1764 = vmatpush1.msra.mxu0 0.0
      %1765 = vmatprep.subr.mxu0 0.0
      %1766 = vmatpush1.msra.mxu0 0.0
      %1767 = vmatprep.subr.mxu0 0.0
      %1768 = vmatpush1.msra.mxu0 0.0
      %1769 = vmatprep.subr.mxu0 0.0
      %1770 = vmatpush1.msra.mxu0 0.0
      %1771 = vmatprep.subr.mxu0 0.0
      %1772 = vmatpush1.msra.mxu0 0.0
      %1773 = vmatprep.subr.mxu0 0.0
      %1774 = vmatpush1.msra.mxu0 0.0
      %1775 = vmatprep.subr.mxu0 0.0
      %1776 = vmatpush1.msra.mxu0 0.0
      %1777 = vmatprep.subr.mxu0 0.0
      %1778 = vmatpush1.msra.mxu0 0.0
      %1779 = vmatprep.subr.mxu0 0.0
      %1780 = vmatpush1.msra.mxu0 0.0
      %1781 = vmatprep.subr.mxu0 0.0
      %1782 = vmatpush1.msra.mxu0 0.0
      %1783 = vmatprep.subr.mxu0 0.0
      %1784 = vmatpush1.msra.mxu0 0.0
      %1785 = vmatprep.subr.mxu0 0.0
      %1786 = vmatpush1.msra.mxu0 0.0
      %1787 = vmatprep.subr.mxu0 0.0
      %1788 = vmatpush1.msra.mxu0 0.0
      %1789 = vmatprep.subr.mxu0 0.0
      %1790 = vmatpush1.msra.mxu0 0.0
      %1791 = vmatprep.subr.mxu0 0.0
      %1792 = vmatpush1.msra.mxu0 0.0
      %1793 = vmatprep.subr.mxu0 0.0
      %1794 = vmatpush1.msra.mxu0 0.0
      %1795 = vmatprep.mubr.f32.mxu0 0.0
      %1796 = vmatmul.mubr.f32.gmra.mrb[0].mxu0 %v1684
      %v1797 = vpop.f32.mrb[0].mxu0
      %v1798 = vadd.f32 0.0, %v1797
      %v1799 = vpop.f32.mrb[0].mxu0
      %1800 = vmatprep.mubr.f32.mxu0 0.0
      %1801 = vmatmul.mubr.f32.gmra.mrb[0].mxu0 %v1687
      %v1802 = vpop.f32.mrb[0].mxu0
      %v1803 = vadd.f32 0.0, %v1802
      %v1804 = vpop.f32.mrb[0].mxu0
      %1805 = vmatprep.mubr.f32.mxu0 0.0
      %1806 = vmatmul.mubr.f32.gmra.mrb[0].mxu0 %v1690
      %v1807 = vpop.f32.mrb[0].mxu0
      %v1808 = vadd.f32 0.0, %v1807
      %v1809 = vpop.f32.mrb[0].mxu0
      %1810 = vmatprep.mubr.f32.mxu0 0.0
      %1811 = vmatmul.mubr.f32.gmra.mrb[0].mxu0 %v1693
      %v1812 = vpop.f32.mrb[0].mxu0
      %v1813 = vadd.f32 0.0, %v1812
      %v1814 = vpop.f32.mrb[0].mxu0
      %1815 = vmatprep.mubr.f32.mxu0 0.0
      %1816 = vmatmul.mubr.f32.gmra.mrb[0].mxu0 %v1696
      %v1817 = vpop.f32.mrb[0].mxu0
      %v1818 = vadd.f32 0.0, %v1817
      %v1819 = vpop.f32.mrb[0].mxu0
      %1820 = vmatprep.mubr.f32.mxu0 0.0
      %1821 = vmatmul.mubr.f32.gmra.mrb[0].mxu0 %v1699
      %v1822 = vpop.f32.mrb[0].mxu0
      %v1823 = vadd.f32 0.0, %v1822
      %v1824 = vpop.f32.mrb[0].mxu0
      %1825 = vmatprep.mubr.f32.mxu0 0.0
      %1826 = vmatmul.mubr.f32.gmra.mrb[0].mxu0 %v1702
      %v1827 = vpop.f32.mrb[0].mxu0
      %v1828 = vadd.f32 0.0, %v1827
      %v1829 = vpop.f32.mrb[0].mxu0
      %1830 = vmatprep.mubr.f32.mxu0 0.0
      %1831 = vmatmul.mubr.f32.gmra.mrb[0].mxu0 %v1705
      %v1832 = vpop.f32.mrb[0].mxu0
      %v1833 = vadd.f32 0.0, %v1832
      %v1834 = vpop.f32.mrb[0].mxu0
      %1835 = vmatprep.mubr.f32.mxu0 0.0
      %1836 = vmatmul.mubr.f32.gmra.mrb[0].mxu0 %v1708
      %v1837 = vpop.f32.mrb[0].mxu0
      %v1838 = vadd.f32 0.0, %v1837
      %v1839 = vpop.f32.mrb[0].mxu0
      %1840 = vmatprep.mubr.f32.mxu0 0.0
      %1841 = vmatmul.mubr.f32.gmra.mrb[0].mxu0 %v1711
      %v1842 = vpop.f32.mrb[0].mxu0
      %v1843 = vadd.f32 0.0, %v1842
      %v1844 = vpop.f32.mrb[0].mxu0
      %1845 = vmatprep.mubr.f32.mxu0 0.0
      %1846 = vmatmul.mubr.f32.gmra.mrb[0].mxu0 %v1714
      %v1847 = vpop.f32.mrb[0].mxu0
      %v1848 = vadd.f32 0.0, %v1847
      %v1849 = vpop.f32.mrb[0].mxu0
      %1850 = vmatprep.mubr.f32.mxu0 0.0
      %1851 = vmatmul.mubr.f32.gmra.mrb[0].mxu0 %v1717
      %v1852 = vpop.f32.mrb[0].mxu0
      %v1853 = vadd.f32 0.0, %v1852
      %v1854 = vpop.f32.mrb[0].mxu0
      %1855 = vmatprep.mubr.f32.mxu0 0.0
      %1856 = vmatmul.mubr.f32.gmra.mrb[0].mxu0 %v1720
      %v1857 = vpop.f32.mrb[0].mxu0
      %v1858 = vadd.f32 0.0, %v1857
      %v1859 = vpop.f32.mrb[0].mxu0
      %1860 = vmatprep.mubr.f32.mxu0 0.0
      %1861 = vmatmul.mubr.f32.gmra.mrb[0].mxu0 %v1723
      %v1862 = vpop.f32.mrb[0].mxu0
      %v1863 = vadd.f32 0.0, %v1862
      %v1864 = vpop.f32.mrb[0].mxu0
      %1865 = vmatprep.mubr.f32.mxu0 0.0
      %1866 = vmatmul.mubr.f32.gmra.mrb[0].mxu0 %v1726
      %v1867 = vpop.f32.mrb[0].mxu0
      %v1868 = vadd.f32 0.0, %v1867
      %v1869 = vpop.f32.mrb[0].mxu0
      %1870 = vmatprep.mubr.f32.mxu0 0.0
      %1871 = vmatmul.mubr.f32.gmra.mrb[0].mxu0 %v1729
      %v1872 = vpop.f32.mrb[0].mxu0
      %v1873 = vadd.f32 0.0, %v1872
      %v1874 = vpop.f32.mrb[0].mxu0
      %1875 = vdwg.mxu0
      %v1876 = vmax.f32 %v1798, 0.0
      %v1877 = vmax.f32 %v1803, 0.0
      %v1878 = vmax.f32 %v1808, 0.0
      %v1879 = vmax.f32 %v1813, 0.0
      %v1880 = vmax.f32 %v1818, 0.0
      %v1881 = vmax.f32 %v1823, 0.0
      %v1882 = vmax.f32 %v1828, 0.0
      %v1883 = vmax.f32 %v1833, 0.0
      %v1884 = vmax.f32 %v1838, 0.0
      %v1885 = vmax.f32 %v1843, 0.0
      %v1886 = vmax.f32 %v1848, 0.0
      %v1887 = vmax.f32 %v1853, 0.0
      %v1888 = vmax.f32 %v1858, 0.0
      %v1889 = vmax.f32 %v1863, 0.0
      %v1890 = vmax.f32 %v1868, 0.0
      %v1891 = vmax.f32 %v1873, 0.0
      %s1892 = scalar_lea.vmem %s4, 32
      %v1893 = vld [vmem:[%s1892] sm:$0xff]
      %v1894 = vld [vmem:[%s1892 + $0x8] sm:$0xff]
      %v1895 = vld [vmem:[%s1892 + $0x10] sm:$0xff]
      %v1896 = vld [vmem:[%s1892 + $0x18] sm:$0xff]
      %v1898 = vsel %vm317, %v1876, 0
      %v1901 = vsel %vm317, %v1877, 0
      %v1904 = vsel %vm317, %v1878, 0
      %v1907 = vsel %vm317, %v1879, 0
      %v1910 = vsel %vm317, %v1880, 0
      %v1913 = vsel %vm317, %v1881, 0
      %v1916 = vsel %vm317, %v1882, 0
      %v1919 = vsel %vm317, %v1883, 0
      %v1922 = vsel %vm317, %v1884, 0
      %v1925 = vsel %vm317, %v1885, 0
      %v1928 = vsel %vm317, %v1886, 0
      %v1931 = vsel %vm317, %v1887, 0
      %v1934 = vsel %vm317, %v1888, 0
      %v1937 = vsel %vm317, %v1889, 0
      %v1940 = vsel %vm317, %v1890, 0
      %v1943 = vsel %vm317, %v1891, 0
      %1945 = vmatprep.subr.mxu0 0.0
      %1946 = vmatpush1.msra.mxu0 %v1893
      %1947 = vmatprep.subr.mxu0 0.0
      %1948 = vmatpush1.msra.mxu0 %v1894
      %1949 = vmatprep.subr.mxu0 0.0
      %1950 = vmatpush1.msra.mxu0 %v1895
      %1951 = vmatprep.subr.mxu0 0.0
      %1952 = vmatpush1.msra.mxu0 %v1896
      %1953 = vmatprep.subr.mxu0 0.0
      %1954 = vmatpush1.msra.mxu0 0.0
      %1955 = vmatprep.subr.mxu0 0.0
      %1956 = vmatpush1.msra.mxu0 0.0
      %1957 = vmatprep.subr.mxu0 0.0
      %1958 = vmatpush1.msra.mxu0 0.0
      %1959 = vmatprep.subr.mxu0 0.0
      %1960 = vmatpush1.msra.mxu0 0.0
      %1961 = vmatprep.subr.mxu0 0.0
      %1962 = vmatpush1.msra.mxu0 0.0
      %1963 = vmatprep.subr.mxu0 0.0
      %1964 = vmatpush1.msra.mxu0 0.0
      %1965 = vmatprep.subr.mxu0 0.0
      %1966 = vmatpush1.msra.mxu0 0.0
      %1967 = vmatprep.subr.mxu0 0.0
      %1968 = vmatpush1.msra.mxu0 0.0
      %1969 = vmatprep.subr.mxu0 0.0
      %1970 = vmatpush1.msra.mxu0 0.0
      %1971 = vmatprep.subr.mxu0 0.0
      %1972 = vmatpush1.msra.mxu0 0.0
      %1973 = vmatprep.subr.mxu0 0.0
      %1974 = vmatpush1.msra.mxu0 0.0
      %1975 = vmatprep.subr.mxu0 0.0
      %1976 = vmatpush1.msra.mxu0 0.0
      %1977 = vmatprep.subr.mxu0 0.0
      %1978 = vmatpush1.msra.mxu0 0.0
      %1979 = vmatprep.subr.mxu0 0.0
      %1980 = vmatpush1.msra.mxu0 0.0
      %1981 = vmatprep.subr.mxu0 0.0
      %1982 = vmatpush1.msra.mxu0 0.0
      %1983 = vmatprep.subr.mxu0 0.0
      %1984 = vmatpush1.msra.mxu0 0.0
      %1985 = vmatprep.subr.mxu0 0.0
      %1986 = vmatpush1.msra.mxu0 0.0
      %1987 = vmatprep.subr.mxu0 0.0
      %1988 = vmatpush1.msra.mxu0 0.0
      %1989 = vmatprep.subr.mxu0 0.0
      %1990 = vmatpush1.msra.mxu0 0.0
      %1991 = vmatprep.subr.mxu0 0.0
      %1992 = vmatpush1.msra.mxu0 0.0
      %1993 = vmatprep.subr.mxu0 0.0
      %1994 = vmatpush1.msra.mxu0 0.0
      %1995 = vmatprep.subr.mxu0 0.0
      %1996 = vmatpush1.msra.mxu0 0.0
      %1997 = vmatprep.subr.mxu0 0.0
      %1998 = vmatpush1.msra.mxu0 0.0
      %1999 = vmatprep.subr.mxu0 0.0
      %2000 = vmatpush1.msra.mxu0 0.0
      %2001 = vmatprep.subr.mxu0 0.0
      %2002 = vmatpush1.msra.mxu0 0.0
      %2003 = vmatprep.subr.mxu0 0.0
      %2004 = vmatpush1.msra.mxu0 0.0
      %2005 = vmatprep.subr.mxu0 0.0
      %2006 = vmatpush1.msra.mxu0 0.0
      %2007 = vmatprep.subr.mxu0 0.0
      %2008 = vmatpush1.msra.mxu0 0.0
      %2009 = vmatprep.mubr.f32.mxu0 0.0
      %2010 = vmatmul.mubr.f32.gmra.mrb[0].mxu0 %v1898
      %v2011 = vpop.f32.mrb[0].mxu0
      %v2012 = vadd.f32 0.0, %v2011
      %v2013 = vpop.f32.mrb[0].mxu0
      %2014 = vmatprep.mubr.f32.mxu0 0.0
      %2015 = vmatmul.mubr.f32.gmra.mrb[0].mxu0 %v1901
      %v2016 = vpop.f32.mrb[0].mxu0
      %v2017 = vadd.f32 0.0, %v2016
      %v2018 = vpop.f32.mrb[0].mxu0
      %2019 = vmatprep.mubr.f32.mxu0 0.0
      %2020 = vmatmul.mubr.f32.gmra.mrb[0].mxu0 %v1904
      %v2021 = vpop.f32.mrb[0].mxu0
      %v2022 = vadd.f32 0.0, %v2021
      %v2023 = vpop.f32.mrb[0].mxu0
      %2024 = vmatprep.mubr.f32.mxu0 0.0
      %2025 = vmatmul.mubr.f32.gmra.mrb[0].mxu0 %v1907
      %v2026 = vpop.f32.mrb[0].mxu0
      %v2027 = vadd.f32 0.0, %v2026
      %v2028 = vpop.f32.mrb[0].mxu0
      %2029 = vmatprep.mubr.f32.mxu0 0.0
      %2030 = vmatmul.mubr.f32.gmra.mrb[0].mxu0 %v1910
      %v2031 = vpop.f32.mrb[0].mxu0
      %v2032 = vadd.f32 0.0, %v2031
      %v2033 = vpop.f32.mrb[0].mxu0
      %2034 = vmatprep.mubr.f32.mxu0 0.0
      %2035 = vmatmul.mubr.f32.gmra.mrb[0].mxu0 %v1913
      %v2036 = vpop.f32.mrb[0].mxu0
      %v2037 = vadd.f32 0.0, %v2036
      %v2038 = vpop.f32.mrb[0].mxu0
      %2039 = vmatprep.mubr.f32.mxu0 0.0
      %2040 = vmatmul.mubr.f32.gmra.mrb[0].mxu0 %v1916
      %v2041 = vpop.f32.mrb[0].mxu0
      %v2042 = vadd.f32 0.0, %v2041
      %v2043 = vpop.f32.mrb[0].mxu0
      %2044 = vmatprep.mubr.f32.mxu0 0.0
      %2045 = vmatmul.mubr.f32.gmra.mrb[0].mxu0 %v1919
      %v2046 = vpop.f32.mrb[0].mxu0
      %v2047 = vadd.f32 0.0, %v2046
      %v2048 = vpop.f32.mrb[0].mxu0
      %2049 = vmatprep.mubr.f32.mxu0 0.0
      %2050 = vmatmul.mubr.f32.gmra.mrb[0].mxu0 %v1922
      %v2051 = vpop.f32.mrb[0].mxu0
      %v2052 = vadd.f32 0.0, %v2051
      %v2053 = vpop.f32.mrb[0].mxu0
      %2054 = vmatprep.mubr.f32.mxu0 0.0
      %2055 = vmatmul.mubr.f32.gmra.mrb[0].mxu0 %v1925
      %v2056 = vpop.f32.mrb[0].mxu0
      %v2057 = vadd.f32 0.0, %v2056
      %v2058 = vpop.f32.mrb[0].mxu0
      %2059 = vmatprep.mubr.f32.mxu0 0.0
      %2060 = vmatmul.mubr.f32.gmra.mrb[0].mxu0 %v1928
      %v2061 = vpop.f32.mrb[0].mxu0
      %v2062 = vadd.f32 0.0, %v2061
      %v2063 = vpop.f32.mrb[0].mxu0
      %2064 = vmatprep.mubr.f32.mxu0 0.0
      %2065 = vmatmul.mubr.f32.gmra.mrb[0].mxu0 %v1931
      %v2066 = vpop.f32.mrb[0].mxu0
      %v2067 = vadd.f32 0.0, %v2066
      %v2068 = vpop.f32.mrb[0].mxu0
      %2069 = vmatprep.mubr.f32.mxu0 0.0
      %2070 = vmatmul.mubr.f32.gmra.mrb[0].mxu0 %v1934
      %v2071 = vpop.f32.mrb[0].mxu0
      %v2072 = vadd.f32 0.0, %v2071
      %v2073 = vpop.f32.mrb[0].mxu0
      %2074 = vmatprep.mubr.f32.mxu0 0.0
      %2075 = vmatmul.mubr.f32.gmra.mrb[0].mxu0 %v1937
      %v2076 = vpop.f32.mrb[0].mxu0
      %v2077 = vadd.f32 0.0, %v2076
      %v2078 = vpop.f32.mrb[0].mxu0
      %2079 = vmatprep.mubr.f32.mxu0 0.0
      %2080 = vmatmul.mubr.f32.gmra.mrb[0].mxu0 %v1940
      %v2081 = vpop.f32.mrb[0].mxu0
      %v2082 = vadd.f32 0.0, %v2081
      %v2083 = vpop.f32.mrb[0].mxu0
      %2084 = vmatprep.mubr.f32.mxu0 0.0
      %2085 = vmatmul.mubr.f32.gmra.mrb[0].mxu0 %v1943
      %v2086 = vpop.f32.mrb[0].mxu0
      %v2087 = vadd.f32 0.0, %v2086
      %v2088 = vpop.f32.mrb[0].mxu0
      %2089 = vdwg.mxu0
      %v2090 = vmax.f32 %v2012, 0.0
      %v2091 = vmax.f32 %v2017, 0.0
      %v2092 = vmax.f32 %v2022, 0.0
      %v2093 = vmax.f32 %v2027, 0.0
      %v2094 = vmax.f32 %v2032, 0.0
      %v2095 = vmax.f32 %v2037, 0.0
      %v2096 = vmax.f32 %v2042, 0.0
      %v2097 = vmax.f32 %v2047, 0.0
      %v2098 = vmax.f32 %v2052, 0.0
      %v2099 = vmax.f32 %v2057, 0.0
      %v2100 = vmax.f32 %v2062, 0.0
      %v2101 = vmax.f32 %v2067, 0.0
      %v2102 = vmax.f32 %v2072, 0.0
      %v2103 = vmax.f32 %v2077, 0.0
      %v2104 = vmax.f32 %v2082, 0.0
      %v2105 = vmax.f32 %v2087, 0.0
      %s2106 = scalar_lea.vmem %s4, 64
      %v2107 = vld [vmem:[%s2106] sm:$0xff]
      %v2108 = vld [vmem:[%s2106 + $0x8] sm:$0xff]
      %v2109 = vld [vmem:[%s2106 + $0x10] sm:$0xff]
      %v2110 = vld [vmem:[%s2106 + $0x18] sm:$0xff]
      %v2112 = vsel %vm317, %v2090, 0
      %v2115 = vsel %vm317, %v2091, 0
      %v2118 = vsel %vm317, %v2092, 0
      %v2121 = vsel %vm317, %v2093, 0
      %v2124 = vsel %vm317, %v2094, 0
      %v2127 = vsel %vm317, %v2095, 0
      %v2130 = vsel %vm317, %v2096, 0
      %v2133 = vsel %vm317, %v2097, 0
      %v2136 = vsel %vm317, %v2098, 0
      %v2139 = vsel %vm317, %v2099, 0
      %v2142 = vsel %vm317, %v2100, 0
      %v2145 = vsel %vm317, %v2101, 0
      %v2148 = vsel %vm317, %v2102, 0
      %v2151 = vsel %vm317, %v2103, 0
      %v2154 = vsel %vm317, %v2104, 0
      %v2157 = vsel %vm317, %v2105, 0
      %2159 = vmatprep.subr.mxu0 0.0
      %2160 = vmatpush1.msra.mxu0 %v2107
      %2161 = vmatprep.subr.mxu0 0.0
      %2162 = vmatpush1.msra.mxu0 %v2108
      %2163 = vmatprep.subr.mxu0 0.0
      %2164 = vmatpush1.msra.mxu0 %v2109
      %2165 = vmatprep.subr.mxu0 0.0
      %2166 = vmatpush1.msra.mxu0 %v2110
      %2167 = vmatprep.subr.mxu0 0.0
      %2168 = vmatpush1.msra.mxu0 0.0
      %2169 = vmatprep.subr.mxu0 0.0
      %2170 = vmatpush1.msra.mxu0 0.0
      %2171 = vmatprep.subr.mxu0 0.0
      %2172 = vmatpush1.msra.mxu0 0.0
      %2173 = vmatprep.subr.mxu0 0.0
      %2174 = vmatpush1.msra.mxu0 0.0
      %2175 = vmatprep.subr.mxu0 0.0
      %2176 = vmatpush1.msra.mxu0 0.0
      %2177 = vmatprep.subr.mxu0 0.0
      %2178 = vmatpush1.msra.mxu0 0.0
      %2179 = vmatprep.subr.mxu0 0.0
      %2180 = vmatpush1.msra.mxu0 0.0
      %2181 = vmatprep.subr.mxu0 0.0
      %2182 = vmatpush1.msra.mxu0 0.0
      %2183 = vmatprep.subr.mxu0 0.0
      %2184 = vmatpush1.msra.mxu0 0.0
      %2185 = vmatprep.subr.mxu0 0.0
      %2186 = vmatpush1.msra.mxu0 0.0
      %2187 = vmatprep.subr.mxu0 0.0
      %2188 = vmatpush1.msra.mxu0 0.0
      %2189 = vmatprep.subr.mxu0 0.0
      %2190 = vmatpush1.msra.mxu0 0.0
      %2191 = vmatprep.subr.mxu0 0.0
      %2192 = vmatpush1.msra.mxu0 0.0
      %2193 = vmatprep.subr.mxu0 0.0
      %2194 = vmatpush1.msra.mxu0 0.0
      %2195 = vmatprep.subr.mxu0 0.0
      %2196 = vmatpush1.msra.mxu0 0.0
      %2197 = vmatprep.subr.mxu0 0.0
      %2198 = vmatpush1.msra.mxu0 0.0
      %2199 = vmatprep.subr.mxu0 0.0
      %2200 = vmatpush1.msra.mxu0 0.0
      %2201 = vmatprep.subr.mxu0 0.0
      %2202 = vmatpush1.msra.mxu0 0.0
      %2203 = vmatprep.subr.mxu0 0.0
      %2204 = vmatpush1.msra.mxu0 0.0
      %2205 = vmatprep.subr.mxu0 0.0
      %2206 = vmatpush1.msra.mxu0 0.0
      %2207 = vmatprep.subr.mxu0 0.0
      %2208 = vmatpush1.msra.mxu0 0.0
      %2209 = vmatprep.subr.mxu0 0.0
      %2210 = vmatpush1.msra.mxu0 0.0
      %2211 = vmatprep.subr.mxu0 0.0
      %2212 = vmatpush1.msra.mxu0 0.0
      %2213 = vmatprep.subr.mxu0 0.0
      %2214 = vmatpush1.msra.mxu0 0.0
      %2215 = vmatprep.subr.mxu0 0.0
      %2216 = vmatpush1.msra.mxu0 0.0
      %2217 = vmatprep.subr.mxu0 0.0
      %2218 = vmatpush1.msra.mxu0 0.0
      %2219 = vmatprep.subr.mxu0 0.0
      %2220 = vmatpush1.msra.mxu0 0.0
      %2221 = vmatprep.subr.mxu0 0.0
      %2222 = vmatpush1.msra.mxu0 0.0
      %2223 = vmatprep.mubr.f32.mxu0 0.0
      %2224 = vmatmul.mubr.f32.gmra.mrb[0].mxu0 %v2112
      %v2225 = vpop.f32.mrb[0].mxu0
      %v2226 = vadd.f32 0.0, %v2225
      %v2227 = vpop.f32.mrb[0].mxu0
      %2228 = vmatprep.mubr.f32.mxu0 0.0
      %2229 = vmatmul.mubr.f32.gmra.mrb[0].mxu0 %v2115
      %v2230 = vpop.f32.mrb[0].mxu0
      %v2231 = vadd.f32 0.0, %v2230
      %v2232 = vpop.f32.mrb[0].mxu0
      %2233 = vmatprep.mubr.f32.mxu0 0.0
      %2234 = vmatmul.mubr.f32.gmra.mrb[0].mxu0 %v2118
      %v2235 = vpop.f32.mrb[0].mxu0
      %v2236 = vadd.f32 0.0, %v2235
      %v2237 = vpop.f32.mrb[0].mxu0
      %2238 = vmatprep.mubr.f32.mxu0 0.0
      %2239 = vmatmul.mubr.f32.gmra.mrb[0].mxu0 %v2121
      %v2240 = vpop.f32.mrb[0].mxu0
      %v2241 = vadd.f32 0.0, %v2240
      %v2242 = vpop.f32.mrb[0].mxu0
      %2243 = vmatprep.mubr.f32.mxu0 0.0
      %2244 = vmatmul.mubr.f32.gmra.mrb[0].mxu0 %v2124
      %v2245 = vpop.f32.mrb[0].mxu0
      %v2246 = vadd.f32 0.0, %v2245
      %v2247 = vpop.f32.mrb[0].mxu0
      %2248 = vmatprep.mubr.f32.mxu0 0.0
      %2249 = vmatmul.mubr.f32.gmra.mrb[0].mxu0 %v2127
      %v2250 = vpop.f32.mrb[0].mxu0
      %v2251 = vadd.f32 0.0, %v2250
      %v2252 = vpop.f32.mrb[0].mxu0
      %2253 = vmatprep.mubr.f32.mxu0 0.0
      %2254 = vmatmul.mubr.f32.gmra.mrb[0].mxu0 %v2130
      %v2255 = vpop.f32.mrb[0].mxu0
      %v2256 = vadd.f32 0.0, %v2255
      %v2257 = vpop.f32.mrb[0].mxu0
      %2258 = vmatprep.mubr.f32.mxu0 0.0
      %2259 = vmatmul.mubr.f32.gmra.mrb[0].mxu0 %v2133
      %v2260 = vpop.f32.mrb[0].mxu0
      %v2261 = vadd.f32 0.0, %v2260
      %v2262 = vpop.f32.mrb[0].mxu0
      %2263 = vmatprep.mubr.f32.mxu0 0.0
      %2264 = vmatmul.mubr.f32.gmra.mrb[0].mxu0 %v2136
      %v2265 = vpop.f32.mrb[0].mxu0
      %v2266 = vadd.f32 0.0, %v2265
      %v2267 = vpop.f32.mrb[0].mxu0
      %2268 = vmatprep.mubr.f32.mxu0 0.0
      %2269 = vmatmul.mubr.f32.gmra.mrb[0].mxu0 %v2139
      %v2270 = vpop.f32.mrb[0].mxu0
      %v2271 = vadd.f32 0.0, %v2270
      %v2272 = vpop.f32.mrb[0].mxu0
      %2273 = vmatprep.mubr.f32.mxu0 0.0
      %2274 = vmatmul.mubr.f32.gmra.mrb[0].mxu0 %v2142
      %v2275 = vpop.f32.mrb[0].mxu0
      %v2276 = vadd.f32 0.0, %v2275
      %v2277 = vpop.f32.mrb[0].mxu0
      %2278 = vmatprep.mubr.f32.mxu0 0.0
      %2279 = vmatmul.mubr.f32.gmra.mrb[0].mxu0 %v2145
      %v2280 = vpop.f32.mrb[0].mxu0
      %v2281 = vadd.f32 0.0, %v2280
      %v2282 = vpop.f32.mrb[0].mxu0
      %2283 = vmatprep.mubr.f32.mxu0 0.0
      %2284 = vmatmul.mubr.f32.gmra.mrb[0].mxu0 %v2148
      %v2285 = vpop.f32.mrb[0].mxu0
      %v2286 = vadd.f32 0.0, %v2285
      %v2287 = vpop.f32.mrb[0].mxu0
      %2288 = vmatprep.mubr.f32.mxu0 0.0
      %2289 = vmatmul.mubr.f32.gmra.mrb[0].mxu0 %v2151
      %v2290 = vpop.f32.mrb[0].mxu0
      %v2291 = vadd.f32 0.0, %v2290
      %v2292 = vpop.f32.mrb[0].mxu0
      %2293 = vmatprep.mubr.f32.mxu0 0.0
      %2294 = vmatmul.mubr.f32.gmra.mrb[0].mxu0 %v2154
      %v2295 = vpop.f32.mrb[0].mxu0
      %v2296 = vadd.f32 0.0, %v2295
      %v2297 = vpop.f32.mrb[0].mxu0
      %2298 = vmatprep.mubr.f32.mxu0 0.0
      %2299 = vmatmul.mubr.f32.gmra.mrb[0].mxu0 %v2157
      %v2300 = vpop.f32.mrb[0].mxu0
      %v2301 = vadd.f32 0.0, %v2300
      %v2302 = vpop.f32.mrb[0].mxu0
      %2303 = vdwg.mxu0
      %v2304 = vadd.f32 %v1663, %v2226
      %v2305 = vadd.f32 %v1664, %v2231
      %v2306 = vadd.f32 %v1665, %v2236
      %v2307 = vadd.f32 %v1666, %v2241
      %v2308 = vadd.f32 %v1667, %v2246
      %v2309 = vadd.f32 %v1668, %v2251
      %v2310 = vadd.f32 %v1669, %v2256
      %v2311 = vadd.f32 %v1670, %v2261
      %v2312 = vadd.f32 %v1671, %v2266
      %v2313 = vadd.f32 %v1672, %v2271
      %v2314 = vadd.f32 %v1673, %v2276
      %v2315 = vadd.f32 %v1674, %v2281
      %v2316 = vadd.f32 %v1675, %v2286
      %v2317 = vadd.f32 %v1676, %v2291
      %v2318 = vadd.f32 %v1677, %v2296
      %v2319 = vadd.f32 %v1678, %v2301
      %v2320 = vmax.f32 %v2304, 0.0
      %v2321 = vmax.f32 %v2305, 0.0
      %v2322 = vmax.f32 %v2306, 0.0
      %v2323 = vmax.f32 %v2307, 0.0
      %v2324 = vmax.f32 %v2308, 0.0
      %v2325 = vmax.f32 %v2309, 0.0
      %v2326 = vmax.f32 %v2310, 0.0
      %v2327 = vmax.f32 %v2311, 0.0
      %v2328 = vmax.f32 %v2312, 0.0
      %v2329 = vmax.f32 %v2313, 0.0
      %v2330 = vmax.f32 %v2314, 0.0
      %v2331 = vmax.f32 %v2315, 0.0
      %v2332 = vmax.f32 %v2316, 0.0
      %v2333 = vmax.f32 %v2317, 0.0
      %v2334 = vmax.f32 %v2318, 0.0
      %v2335 = vmax.f32 %v2319, 0.0
      %v2336 = vld [vmem:[%s5] sm:$0x1]
      %v2337 = vld [vmem:[%s5 + $0x1] sm:$0x1]
      %v2338 = vlaneseq
      %v2339 = vshrl.u32 %v2338, 7
      %v2340 = vsub.s32 0, %v2339
      %v2341 = vrot.slane %v2336, %v2340
      %v2342 = vmul.f32 %v2320, %v2341
      %v2343 = vmul.f32 %v2321, %v2341
      %v2344 = vmul.f32 %v2322, %v2341
      %v2345 = vmul.f32 %v2323, %v2341
      %v2346 = vmul.f32 %v2324, %v2341
      %v2347 = vmul.f32 %v2325, %v2341
      %v2348 = vmul.f32 %v2326, %v2341
      %v2349 = vmul.f32 %v2327, %v2341
      %v2350 = vmul.f32 %v2328, %v2341
      %v2351 = vmul.f32 %v2329, %v2341
      %v2352 = vmul.f32 %v2330, %v2341
      %v2353 = vmul.f32 %v2331, %v2341
      %v2354 = vmul.f32 %v2332, %v2341
      %v2355 = vmul.f32 %v2333, %v2341
      %v2356 = vmul.f32 %v2334, %v2341
      %v2357 = vmul.f32 %v2335, %v2341
      %v2358 = vsel %vm317, %v2342, 0.0
      %2359 = vadd.xlane.f32.xlu0 %v2358
      %v2360 = vpop.xlane.xlu0 %2359
      %v2361 = vsel %vm317, %v2343, 0.0
      %2362 = vadd.xlane.f32.xlu0 %v2361
      %v2363 = vpop.xlane.xlu0 %2362
      %v2364 = vsel %vm317, %v2344, 0.0
      %2365 = vadd.xlane.f32.xlu0 %v2364
      %v2366 = vpop.xlane.xlu0 %2365
      %v2367 = vsel %vm317, %v2345, 0.0
      %2368 = vadd.xlane.f32.xlu0 %v2367
      %v2369 = vpop.xlane.xlu0 %2368
      %v2370 = vsel %vm317, %v2346, 0.0
      %2371 = vadd.xlane.f32.xlu0 %v2370
      %v2372 = vpop.xlane.xlu0 %2371
      %v2373 = vsel %vm317, %v2347, 0.0
      %2374 = vadd.xlane.f32.xlu0 %v2373
      %v2375 = vpop.xlane.xlu0 %2374
      %v2376 = vsel %vm317, %v2348, 0.0
      %2377 = vadd.xlane.f32.xlu0 %v2376
      %v2378 = vpop.xlane.xlu0 %2377
      %v2379 = vsel %vm317, %v2349, 0.0
      %2380 = vadd.xlane.f32.xlu0 %v2379
      %v2381 = vpop.xlane.xlu0 %2380
      %v2382 = vsel %vm317, %v2350, 0.0
      %2383 = vadd.xlane.f32.xlu0 %v2382
      %v2384 = vpop.xlane.xlu0 %2383
      %v2385 = vsel %vm317, %v2351, 0.0
      %2386 = vadd.xlane.f32.xlu0 %v2385
      %v2387 = vpop.xlane.xlu0 %2386
      %v2388 = vsel %vm317, %v2352, 0.0
      %2389 = vadd.xlane.f32.xlu0 %v2388
      %v2390 = vpop.xlane.xlu0 %2389
      %v2391 = vsel %vm317, %v2353, 0.0
      %2392 = vadd.xlane.f32.xlu0 %v2391
      %v2393 = vpop.xlane.xlu0 %2392
      %v2394 = vsel %vm317, %v2354, 0.0
      %2395 = vadd.xlane.f32.xlu0 %v2394
      %v2396 = vpop.xlane.xlu0 %2395
      %v2397 = vsel %vm317, %v2355, 0.0
      %2398 = vadd.xlane.f32.xlu0 %v2397
      %v2399 = vpop.xlane.xlu0 %2398
      %v2400 = vsel %vm317, %v2356, 0.0
      %2401 = vadd.xlane.f32.xlu0 %v2400
      %v2402 = vpop.xlane.xlu0 %2401
      %v2403 = vsel %vm317, %v2357, 0.0
      %2404 = vadd.xlane.f32.xlu0 %v2403
      %v2405 = vpop.xlane.xlu0 %2404
      %v2406 = vlaneseq
      %v2407 = vshrl.u32 %v2406, 7
      %v2408 = vsub.s32 0, %v2407
      %v2409 = vrot.slane %v2337, %v2408
      %v2410 = vmul.f32 %v2320, %v2409
      %v2411 = vmul.f32 %v2321, %v2409
      %v2412 = vmul.f32 %v2322, %v2409
      %v2413 = vmul.f32 %v2323, %v2409
      %v2414 = vmul.f32 %v2324, %v2409
      %v2415 = vmul.f32 %v2325, %v2409
      %v2416 = vmul.f32 %v2326, %v2409
      %v2417 = vmul.f32 %v2327, %v2409
      %v2418 = vmul.f32 %v2328, %v2409
      %v2419 = vmul.f32 %v2329, %v2409
      %v2420 = vmul.f32 %v2330, %v2409
      %v2421 = vmul.f32 %v2331, %v2409
      %v2422 = vmul.f32 %v2332, %v2409
      %v2423 = vmul.f32 %v2333, %v2409
      %v2424 = vmul.f32 %v2334, %v2409
      %v2425 = vmul.f32 %v2335, %v2409
      %v2426 = vsel %vm317, %v2410, 0.0
      %2427 = vadd.xlane.f32.xlu0 %v2426
      %v2428 = vpop.xlane.xlu0 %2427
      %v2429 = vsel %vm317, %v2411, 0.0
      %2430 = vadd.xlane.f32.xlu0 %v2429
      %v2431 = vpop.xlane.xlu0 %2430
      %v2432 = vsel %vm317, %v2412, 0.0
      %2433 = vadd.xlane.f32.xlu0 %v2432
      %v2434 = vpop.xlane.xlu0 %2433
      %v2435 = vsel %vm317, %v2413, 0.0
      %2436 = vadd.xlane.f32.xlu0 %v2435
      %v2437 = vpop.xlane.xlu0 %2436
      %v2438 = vsel %vm317, %v2414, 0.0
      %2439 = vadd.xlane.f32.xlu0 %v2438
      %v2440 = vpop.xlane.xlu0 %2439
      %v2441 = vsel %vm317, %v2415, 0.0
      %2442 = vadd.xlane.f32.xlu0 %v2441
      %v2443 = vpop.xlane.xlu0 %2442
      %v2444 = vsel %vm317, %v2416, 0.0
      %2445 = vadd.xlane.f32.xlu0 %v2444
      %v2446 = vpop.xlane.xlu0 %2445
      %v2447 = vsel %vm317, %v2417, 0.0
      %2448 = vadd.xlane.f32.xlu0 %v2447
      %v2449 = vpop.xlane.xlu0 %2448
      %v2450 = vsel %vm317, %v2418, 0.0
      %2451 = vadd.xlane.f32.xlu0 %v2450
      %v2452 = vpop.xlane.xlu0 %2451
      %v2453 = vsel %vm317, %v2419, 0.0
      %2454 = vadd.xlane.f32.xlu0 %v2453
      %v2455 = vpop.xlane.xlu0 %2454
      %v2456 = vsel %vm317, %v2420, 0.0
      %2457 = vadd.xlane.f32.xlu0 %v2456
      %v2458 = vpop.xlane.xlu0 %2457
      %v2459 = vsel %vm317, %v2421, 0.0
      %2460 = vadd.xlane.f32.xlu0 %v2459
      %v2461 = vpop.xlane.xlu0 %2460
      %v2462 = vsel %vm317, %v2422, 0.0
      %2463 = vadd.xlane.f32.xlu0 %v2462
      %v2464 = vpop.xlane.xlu0 %2463
      %v2465 = vsel %vm317, %v2423, 0.0
      %2466 = vadd.xlane.f32.xlu0 %v2465
      %v2467 = vpop.xlane.xlu0 %2466
      %v2468 = vsel %vm317, %v2424, 0.0
      %2469 = vadd.xlane.f32.xlu0 %v2468
      %v2470 = vpop.xlane.xlu0 %2469
      %v2471 = vsel %vm317, %v2425, 0.0
      %2472 = vadd.xlane.f32.xlu0 %v2471
      %v2473 = vpop.xlane.xlu0 %2472
      %vm2474 = vcmask 7168
      %v2475 = vsel %vm2474, %v2360, %v2428
      %v2476 = vsel %vm2474, %v2363, %v2431
      %v2477 = vsel %vm2474, %v2366, %v2434
      %v2478 = vsel %vm2474, %v2369, %v2437
      %v2479 = vsel %vm2474, %v2372, %v2440
      %v2480 = vsel %vm2474, %v2375, %v2443
      %v2481 = vsel %vm2474, %v2378, %v2446
      %v2482 = vsel %vm2474, %v2381, %v2449
      %v2483 = vsel %vm2474, %v2384, %v2452
      %v2484 = vsel %vm2474, %v2387, %v2455
      %v2485 = vsel %vm2474, %v2390, %v2458
      %v2486 = vsel %vm2474, %v2393, %v2461
      %v2487 = vsel %vm2474, %v2396, %v2464
      %v2488 = vsel %vm2474, %v2399, %v2467
      %v2489 = vsel %vm2474, %v2402, %v2470
      %v2490 = vsel %vm2474, %v2405, %v2473
      %vm2491 = vcmask 15360
      %2492 = vst.msk [vmem:[%s275] sm:$0xff] %vm2491, %v2475
      %2493 = vst.msk [vmem:[%s275 + $0x8] sm:$0xff] %vm2491, %v2476
      %2494 = vst.msk [vmem:[%s275 + $0x10] sm:$0xff] %vm2491, %v2477
      %2495 = vst.msk [vmem:[%s275 + $0x18] sm:$0xff] %vm2491, %v2478
      %2496 = vst.msk [vmem:[%s275 + $0x20] sm:$0xff] %vm2491, %v2479
      %2497 = vst.msk [vmem:[%s275 + $0x28] sm:$0xff] %vm2491, %v2480
      %2498 = vst.msk [vmem:[%s275 + $0x30] sm:$0xff] %vm2491, %v2481
      %2499 = vst.msk [vmem:[%s275 + $0x38] sm:$0xff] %vm2491, %v2482
      %2500 = vst.msk [vmem:[%s275 + $0x40] sm:$0xff] %vm2491, %v2483
      %2501 = vst.msk [vmem:[%s275 + $0x48] sm:$0xff] %vm2491, %v2484
      %2502 = vst.msk [vmem:[%s275 + $0x50] sm:$0xff] %vm2491, %v2485
      %2503 = vst.msk [vmem:[%s275 + $0x58] sm:$0xff] %vm2491, %v2486
      %2504 = vst.msk [vmem:[%s275 + $0x60] sm:$0xff] %vm2491, %v2487
      %2505 = vst.msk [vmem:[%s275 + $0x68] sm:$0xff] %vm2491, %v2488
      %2506 = vst.msk [vmem:[%s275 + $0x70] sm:$0xff] %vm2491, %v2489
      %2507 = vst.msk [vmem:[%s275 + $0x78] sm:$0xff] %vm2491, %v2490
      %s2508 = smul.u32 16, %s17
      %p2509 = scmp.lt.s32.totalorder %s2508, 31
      %s2510 = scalar_select %p2509, %s2508, 31
      %s2511 = smul.addr %s2510, 8
      %s2512 = scalar_lea.vmem %s6, %s2511
      // Predicated region
      $region45: #{tpu_custom_call.1} parent=43 // pred_check
        %p2513 = pneg %p171
      $region46: #{tpu_custom_call.1} parent=43 // pred_check_branch
        %2515 = sbr.rel (%p2513) target = $region48
      $region47: #{tpu_custom_call.1} parent=43 // pred_region
        %s2516 = smul.u32 16, %s17
      $region48: #{tpu_custom_call.1} parent=43 // pred_fallthru
        _
    $region44: #{tpu_custom_call.1} parent=5 // pred_fallthru
      _
    %p2517 = scmp.le.s32.totalorder 2, %s12
    // Predicated region
    $region49: #{tpu_custom_call.1} parent=5 // pred_check
      %p2518 = pneg %p2517
    $region50: #{tpu_custom_call.1} parent=5 // pred_check_branch
      %2520 = sbr.rel (%p2518) target = $region52
    $region51: #{tpu_custom_call.1} parent=5 // pred_region
      %s2521 = ssub.s32 %s12, 2
      // Predicated region
      $region53: #{tpu_custom_call.1} parent=51 // pred_check
        %p2522 = pneg %p177
      $region54: #{tpu_custom_call.1} parent=51 // pred_check_branch
        %2524 = sbr.rel (%p2522) target = $region56
      $region55: #{tpu_custom_call.1} parent=51 // pred_region
        %s2525 = smul.u32 16, %s18
        %p2526 = scmp.lt.s32.totalorder %s2525, 31
        %s2527 = scalar_select %p2526, %s2525, 31
        %s2528 = smul.addr %s2527, 8
        %s2529 = scalar_lea.vmem %s6, %s2528
      $region56: #{tpu_custom_call.1} parent=51 // pred_fallthru
        _
    $region52: #{tpu_custom_call.1} parent=5 // pred_fallthru
      _
  $region6: #{tpu_custom_call.1} parent=0 // loop_footer
    %s16 = sadd.s32 1, %s12
  $region7: #{tpu_custom_call.1} parent=0 // loop_footer_branch
    %11 = sbr.rel target = $region3
  $region8: #{tpu_custom_call.1} parent=0 // loop_exit
    _

</llo_original>
